<compile_context>
chip_gen: v7x
topology: tpu7x:2x2x1
jax: 0.10.0
libtpu: 0.0.40
codegen_flags: <defaults>
</compile_context>

<pallas_src>
import functools

import jax
import jax.numpy as jnp
import numpy as np
from jax.experimental import pallas as pl
from jax.experimental.pallas import tpu as pltpu

LANE = 128  # lane-dense width for the padded classifier output


def fused_directnet_kernel(x_ref, w_aux_ref, b_aux_ref, w_main_ref, b_main_ref,
                           w1_ref, b1_ref, w2_ref, b2_ref, out_ref, *, S, B):
    """Fused per-slice encoders + fc head, everything resident in VMEM.

    x_ref:     (S*B, HW)   bf16, rows slice-major: row = s*B + b
    w_aux_ref: (HW, D)     bf16   encoder weight for slices 0..S-2
    b_aux_ref: (1, D)      f32
    w_main_ref:(HW, D)     bf16   encoder weight for the last slice
    b_main_ref:(1, D)      f32
    w1_ref:    (S, D, HID) bf16   fc[0] weight viewed per slice
    b1_ref:    (1, HID)    f32
    w2_ref:    (HID, 128)  bf16   fc[3] weight zero-padded to 128 lanes
    b2_ref:    (1, 128)    f32
    out_ref:   (B, 128)    f32
    """
    x = x_ref[...]                                               # (S*B, HW) bf16

    # ---- encoders -------------------------------------------------------
    # One batched MXU call covers every slice with the aux encoder (the last
    # slice's B rows are computed but unused -- negligible waste, keeps the
    # operand full / aligned).
    feat = jnp.dot(x, w_aux_ref[...], preferred_element_type=jnp.float32)
    feat = jnp.maximum(feat + b_aux_ref[...], 0.0)               # (S*B, D) f32

    x_main = x[(S - 1) * B:, :]                                  # (B, HW) last slice
    feat_main = jnp.dot(x_main, w_main_ref[...],
                        preferred_element_type=jnp.float32)
    feat_main = jnp.maximum(feat_main + b_main_ref[...], 0.0)    # (B, D) f32

    # ---- streaming fc head:  h = cat(feats) @ W1 = sum_s feat_s @ W1[s] --
    h = jnp.dot(feat_main.astype(jnp.bfloat16), w1_ref[S - 1],
                preferred_element_type=jnp.float32)              # (B, HID)
    for s in range(S - 1):                                       # unrolled (trace time)
        f_s = feat[s * B:(s + 1) * B, :].astype(jnp.bfloat16)    # (B, D)
        h = h + jnp.dot(f_s, w1_ref[s], preferred_element_type=jnp.float32)

    h = jnp.maximum(h + b1_ref[...], 0.0)            # Dropout (eval: identity) -> ReLU
    out_ref[...] = (jnp.dot(h.astype(jnp.bfloat16), w2_ref[...],
                            preferred_element_type=jnp.float32)
                    + b2_ref[...])                               # (B, 128) f32


def _full_spec(shape):
    n = len(shape)
    return pl.BlockSpec(shape, lambda *_: (0,) * n)


def prepare_params(params):
    """One-time conversion of f32 params to the kernel layout (bf16, padded)."""
    D = params["w_aux"].shape[1]
    HID = params["w1"].shape[1]
    S = params["w1"].shape[0] // D
    C = params["w2"].shape[1]
    bf16, f32 = jnp.bfloat16, jnp.float32
    w2p = jnp.zeros((HID, LANE), f32).at[:, :C].set(params["w2"]).astype(bf16)
    b2p = jnp.zeros((1, LANE), f32).at[0, :C].set(params["b2"])
    prep = dict(
        w_aux=params["w_aux"].astype(bf16),
        b_aux=params["b_aux"].reshape(1, D).astype(f32),
        w_main=params["w_main"].astype(bf16),
        b_main=params["b_main"].reshape(1, D).astype(f32),
        w1=params["w1"].reshape(S, D, HID).astype(bf16),   # free reshape
        b1=params["b1"].reshape(1, HID).astype(f32),
        w2=w2p,
        b2=b2p,
    )
    return prep, S, C


@functools.partial(jax.jit, static_argnames=("num_classes",))
def directnet_forward(x, prep, *, num_classes):
    B, S, H, W = x.shape
    HW = H * W
    D = prep["w_aux"].shape[1]
    HID = prep["b1"].shape[1]

    # Slice-major flatten + bf16 cast; XLA fuses this into one tiny op (~20 KB).
    xs = jnp.transpose(x.reshape(B, S, HW), (1, 0, 2)).reshape(S * B, HW)
    xs = xs.astype(jnp.bfloat16)

    kernel = functools.partial(fused_directnet_kernel, S=S, B=B)
    out_pad = pl.pallas_call(
        kernel,
        out_shape=jax.ShapeDtypeStruct((B, LANE), jnp.float32),
        grid_spec=pltpu.PrefetchScalarGridSpec(
            num_scalar_prefetch=0,
            grid=(1,),
            in_specs=[
                _full_spec((S * B, HW)),
                _full_spec((HW, D)), _full_spec((1, D)),
                _full_spec((HW, D)), _full_spec((1, D)),
                _full_spec((S, D, HID)), _full_spec((1, HID)),
                _full_spec((HID, LANE)), _full_spec((1, LANE)),
            ],
            out_specs=_full_spec((B, LANE)),
        ),
    )(xs, prep["w_aux"], prep["b_aux"], prep["w_main"], prep["b_main"],
      prep["w1"], prep["b1"], prep["w2"], prep["b2"])

    return out_pad[:, :num_classes]


def reference_forward(x, params):
    """Pure-JAX reference with matching bf16 rounding of matmul operands."""
    def q(a):  # bf16 round-trip (matches the kernel's operand precision)
        return a.astype(jnp.bfloat16).astype(jnp.float32)

    B, S, H, W = x.shape
    HW = H * W
    xq = q(x.reshape(B, S, HW))
    w_aux, w_main = q(params["w_aux"]), q(params["w_main"])
    feats = []
    for i in range(S - 1):
        feats.append(jnp.maximum(xq[:, i] @ w_aux + params["b_aux"], 0.0))
    feats.append(jnp.maximum(xq[:, -1] @ w_main + params["b_main"], 0.0))
    cat = q(jnp.concatenate(feats, axis=1))
    h = jnp.maximum(cat @ q(params["w1"]) + params["b1"], 0.0)
    return q(h) @ q(params["w2"]) + params["b2"]


if __name__ == "__main__":
    B, S, H, W = 2, 10, 16, 16        # x.size(1) == 10  =>  fc input = 10 * encode_dim
    ENCODE_DIM, HIDDEN, NUM_CLASSES = 128, 256, 8
    HW = H * W

    key = jax.random.PRNGKey(0)
    k = jax.random.split(key, 9)
    params = {
        "w_aux":  jax.random.normal(k[0], (HW, ENCODE_DIM), jnp.float32) * 0.05,
        "b_aux":  jax.random.normal(k[1], (ENCODE_DIM,), jnp.float32) * 0.01,
        "w_main": jax.random.normal(k[2], (HW, ENCODE_DIM), jnp.float32) * 0.05,
        "b_main": jax.random.normal(k[3], (ENCODE_DIM,), jnp.float32) * 0.01,
        "w1":     jax.random.normal(k[4], (S * ENCODE_DIM, HIDDEN), jnp.float32) * 0.02,
        "b1":     jax.random.normal(k[5], (HIDDEN,), jnp.float32) * 0.01,
        "w2":     jax.random.normal(k[6], (HIDDEN, NUM_CLASSES), jnp.float32) * 0.05,
        "b2":     jax.random.normal(k[7], (NUM_CLASSES,), jnp.float32) * 0.01,
    }
    x = jax.random.normal(k[8], (B, S, H, W), jnp.float32)

    prep, S_detected, C = prepare_params(params)
    assert S_detected == S and C == NUM_CLASSES

    out = directnet_forward(x, prep, num_classes=C)
    out = jax.block_until_ready(out)

    ref = reference_forward(x, params)
    if not np.allclose(np.asarray(out), np.asarray(ref), rtol=1e-3, atol=1e-3):
        max_err = float(np.max(np.abs(np.asarray(out) - np.asarray(ref))))
        raise AssertionError(
            f"Pallas output does not match reference (max abs err {max_err})")
    assert out.shape == (B, NUM_CLASSES)
    print("KERNEL_OK")
</pallas_src>

<mosaic_0001>
module attributes {stable_mosaic.version = 11 : i64} {
  func.func @fused_directnet_kernel(%arg0: i32, %arg1: memref<20x256xbf16, #tpu.memory_space<vmem>>, %arg2: memref<256x128xbf16, #tpu.memory_space<vmem>>, %arg3: memref<1x128xf32, #tpu.memory_space<vmem>>, %arg4: memref<256x128xbf16, #tpu.memory_space<vmem>>, %arg5: memref<1x128xf32, #tpu.memory_space<vmem>>, %arg6: memref<10x128x256xbf16, #tpu.memory_space<vmem>>, %arg7: memref<1x256xf32, #tpu.memory_space<vmem>>, %arg8: memref<256x128xbf16, #tpu.memory_space<vmem>>, %arg9: memref<1x128xf32, #tpu.memory_space<vmem>>, %arg10: memref<2x128xf32, #tpu.memory_space<vmem>>) attributes {dimension_semantics = [#tpu.dimension_semantics<arbitrary>], iteration_bounds = array<i64: 1>, scalar_prefetch = 0 : i64, scratch_operands = 0 : i64, tpu.core_type = #tpu.core_type<tc>, window_params = [{pipeline_mode = #tpu.pipeline_mode<synchronous>, transform_indices = @transform_0, window_bounds = array<i64: 20, 256>}, {pipeline_mode = #tpu.pipeline_mode<synchronous>, transform_indices = @transform_1, window_bounds = array<i64: 256, 128>}, {pipeline_mode = #tpu.pipeline_mode<synchronous>, transform_indices = @transform_2, window_bounds = array<i64: 1, 128>}, {pipeline_mode = #tpu.pipeline_mode<synchronous>, transform_indices = @transform_3, window_bounds = array<i64: 256, 128>}, {pipeline_mode = #tpu.pipeline_mode<synchronous>, transform_indices = @transform_4, window_bounds = array<i64: 1, 128>}, {pipeline_mode = #tpu.pipeline_mode<synchronous>, transform_indices = @transform_5, window_bounds = array<i64: 10, 128, 256>}, {pipeline_mode = #tpu.pipeline_mode<synchronous>, transform_indices = @transform_6, window_bounds = array<i64: 1, 256>}, {pipeline_mode = #tpu.pipeline_mode<synchronous>, transform_indices = @transform_7, window_bounds = array<i64: 256, 128>}, {pipeline_mode = #tpu.pipeline_mode<synchronous>, transform_indices = @transform_8, window_bounds = array<i64: 1, 128>}, {pipeline_mode = #tpu.pipeline_mode<synchronous>, transform_indices = @transform_9, window_bounds = array<i64: 2, 128>}]} {
    %c0 = arith.constant 0 : index
    %c0_0 = arith.constant 0 : index
    %0 = vector.load %arg1[%c0, %c0_0] : memref<20x256xbf16, #tpu.memory_space<vmem>>, vector<20x256xbf16>
    %c0_1 = arith.constant 0 : index
    %c0_2 = arith.constant 0 : index
    %1 = vector.load %arg2[%c0_1, %c0_2] : memref<256x128xbf16, #tpu.memory_space<vmem>>, vector<256x128xbf16>
    %cst = arith.constant dense<0.000000e+00> : vector<20x128xf32>
    %2 = tpu.matmul %0, %1, %cst {dimension_numbers = #tpu.dot_dimension_numbers<[1], [0], [0], [1], [0, 0, 1, 1], [], []>} : vector<20x256xbf16>, vector<256x128xbf16>, vector<20x128xf32> -> vector<20x128xf32>
    %c0_3 = arith.constant 0 : index
    %c0_4 = arith.constant 0 : index
    %3 = vector.load %arg3[%c0_3, %c0_4] : memref<1x128xf32, #tpu.memory_space<vmem>>, vector<1x128xf32>
    %4 = vector.broadcast %3 : vector<1x128xf32> to vector<20x128xf32>
    %5 = arith.addf %2, %4 : vector<20x128xf32>
    %cst_5 = arith.constant 0.000000e+00 : f32
    %6 = vector.broadcast %cst_5 : f32 to vector<20x128xf32>
    %7 = arith.maximumf %5, %6 : vector<20x128xf32>
    %8 = vector.extract_strided_slice %0 {offsets = [18, 0], sizes = [2, 256], strides = [1, 1]} : vector<20x256xbf16> to vector<2x256xbf16>
    %c0_6 = arith.constant 0 : index
    %c0_7 = arith.constant 0 : index
    %9 = vector.load %arg4[%c0_6, %c0_7] : memref<256x128xbf16, #tpu.memory_space<vmem>>, vector<256x128xbf16>
    %cst_8 = arith.constant dense<0.000000e+00> : vector<2x128xf32>
    %10 = tpu.matmul %8, %9, %cst_8 {dimension_numbers = #tpu.dot_dimension_numbers<[1], [0], [0], [1], [0, 0, 1, 1], [], []>} : vector<2x256xbf16>, vector<256x128xbf16>, vector<2x128xf32> -> vector<2x128xf32>
    %c0_9 = arith.constant 0 : index
    %c0_10 = arith.constant 0 : index
    %11 = vector.load %arg5[%c0_9, %c0_10] : memref<1x128xf32, #tpu.memory_space<vmem>>, vector<1x128xf32>
    %12 = vector.broadcast %11 : vector<1x128xf32> to vector<2x128xf32>
    %13 = arith.addf %10, %12 : vector<2x128xf32>
    %cst_11 = arith.constant 0.000000e+00 : f32
    %14 = vector.broadcast %cst_11 : f32 to vector<2x128xf32>
    %15 = arith.maximumf %13, %14 : vector<2x128xf32>
    %16 = arith.truncf %15 : vector<2x128xf32> to vector<2x128xbf16>
    %c9 = arith.constant 9 : index
    %c0_12 = arith.constant 0 : index
    %c0_13 = arith.constant 0 : index
    %17 = vector.load %arg6[%c9, %c0_12, %c0_13] : memref<10x128x256xbf16, #tpu.memory_space<vmem>>, vector<1x128x256xbf16>
    %18 = vector.shape_cast %17 : vector<1x128x256xbf16> to vector<128x256xbf16>
    %cst_14 = arith.constant dense<0.000000e+00> : vector<2x256xf32>
    %19 = tpu.matmul %16, %18, %cst_14 {dimension_numbers = #tpu.dot_dimension_numbers<[1], [0], [0], [1], [0, 0, 1, 1], [], []>} : vector<2x128xbf16>, vector<128x256xbf16>, vector<2x256xf32> -> vector<2x256xf32>
    %20 = vector.extract_strided_slice %7 {offsets = [0, 0], sizes = [2, 128], strides = [1, 1]} : vector<20x128xf32> to vector<2x128xf32>
    %21 = arith.truncf %20 : vector<2x128xf32> to vector<2x128xbf16>
    %c0_15 = arith.constant 0 : index
    %c0_16 = arith.constant 0 : index
    %c0_17 = arith.constant 0 : index
    %22 = vector.load %arg6[%c0_15, %c0_16, %c0_17] : memref<10x128x256xbf16, #tpu.memory_space<vmem>>, vector<1x128x256xbf16>
    %23 = vector.shape_cast %22 : vector<1x128x256xbf16> to vector<128x256xbf16>
    %cst_18 = arith.constant dense<0.000000e+00> : vector<2x256xf32>
    %24 = tpu.matmul %21, %23, %cst_18 {dimension_numbers = #tpu.dot_dimension_numbers<[1], [0], [0], [1], [0, 0, 1, 1], [], []>} : vector<2x128xbf16>, vector<128x256xbf16>, vector<2x256xf32> -> vector<2x256xf32>
    %25 = arith.addf %19, %24 : vector<2x256xf32>
    %26 = vector.extract_strided_slice %7 {offsets = [2, 0], sizes = [2, 128], strides = [1, 1]} : vector<20x128xf32> to vector<2x128xf32>
    %27 = arith.truncf %26 : vector<2x128xf32> to vector<2x128xbf16>
    %c1 = arith.constant 1 : index
    %c0_19 = arith.constant 0 : index
    %c0_20 = arith.constant 0 : index
    %28 = vector.load %arg6[%c1, %c0_19, %c0_20] : memref<10x128x256xbf16, #tpu.memory_space<vmem>>, vector<1x128x256xbf16>
    %29 = vector.shape_cast %28 : vector<1x128x256xbf16> to vector<128x256xbf16>
    %cst_21 = arith.constant dense<0.000000e+00> : vector<2x256xf32>
    %30 = tpu.matmul %27, %29, %cst_21 {dimension_numbers = #tpu.dot_dimension_numbers<[1], [0], [0], [1], [0, 0, 1, 1], [], []>} : vector<2x128xbf16>, vector<128x256xbf16>, vector<2x256xf32> -> vector<2x256xf32>
    %31 = arith.addf %25, %30 : vector<2x256xf32>
    %32 = vector.extract_strided_slice %7 {offsets = [4, 0], sizes = [2, 128], strides = [1, 1]} : vector<20x128xf32> to vector<2x128xf32>
    %33 = arith.truncf %32 : vector<2x128xf32> to vector<2x128xbf16>
    %c2 = arith.constant 2 : index
    %c0_22 = arith.constant 0 : index
    %c0_23 = arith.constant 0 : index
    %34 = vector.load %arg6[%c2, %c0_22, %c0_23] : memref<10x128x256xbf16, #tpu.memory_space<vmem>>, vector<1x128x256xbf16>
    %35 = vector.shape_cast %34 : vector<1x128x256xbf16> to vector<128x256xbf16>
    %cst_24 = arith.constant dense<0.000000e+00> : vector<2x256xf32>
    %36 = tpu.matmul %33, %35, %cst_24 {dimension_numbers = #tpu.dot_dimension_numbers<[1], [0], [0], [1], [0, 0, 1, 1], [], []>} : vector<2x128xbf16>, vector<128x256xbf16>, vector<2x256xf32> -> vector<2x256xf32>
    %37 = arith.addf %31, %36 : vector<2x256xf32>
    %38 = vector.extract_strided_slice %7 {offsets = [6, 0], sizes = [2, 128], strides = [1, 1]} : vector<20x128xf32> to vector<2x128xf32>
    %39 = arith.truncf %38 : vector<2x128xf32> to vector<2x128xbf16>
    %c3 = arith.constant 3 : index
    %c0_25 = arith.constant 0 : index
    %c0_26 = arith.constant 0 : index
    %40 = vector.load %arg6[%c3, %c0_25, %c0_26] : memref<10x128x256xbf16, #tpu.memory_space<vmem>>, vector<1x128x256xbf16>
    %41 = vector.shape_cast %40 : vector<1x128x256xbf16> to vector<128x256xbf16>
    %cst_27 = arith.constant dense<0.000000e+00> : vector<2x256xf32>
    %42 = tpu.matmul %39, %41, %cst_27 {dimension_numbers = #tpu.dot_dimension_numbers<[1], [0], [0], [1], [0, 0, 1, 1], [], []>} : vector<2x128xbf16>, vector<128x256xbf16>, vector<2x256xf32> -> vector<2x256xf32>
    %43 = arith.addf %37, %42 : vector<2x256xf32>
    %44 = vector.extract_strided_slice %7 {offsets = [8, 0], sizes = [2, 128], strides = [1, 1]} : vector<20x128xf32> to vector<2x128xf32>
    %45 = arith.truncf %44 : vector<2x128xf32> to vector<2x128xbf16>
    %c4 = arith.constant 4 : index
    %c0_28 = arith.constant 0 : index
    %c0_29 = arith.constant 0 : index
    %46 = vector.load %arg6[%c4, %c0_28, %c0_29] : memref<10x128x256xbf16, #tpu.memory_space<vmem>>, vector<1x128x256xbf16>
    %47 = vector.shape_cast %46 : vector<1x128x256xbf16> to vector<128x256xbf16>
    %cst_30 = arith.constant dense<0.000000e+00> : vector<2x256xf32>
    %48 = tpu.matmul %45, %47, %cst_30 {dimension_numbers = #tpu.dot_dimension_numbers<[1], [0], [0], [1], [0, 0, 1, 1], [], []>} : vector<2x128xbf16>, vector<128x256xbf16>, vector<2x256xf32> -> vector<2x256xf32>
    %49 = arith.addf %43, %48 : vector<2x256xf32>
    %50 = vector.extract_strided_slice %7 {offsets = [10, 0], sizes = [2, 128], strides = [1, 1]} : vector<20x128xf32> to vector<2x128xf32>
    %51 = arith.truncf %50 : vector<2x128xf32> to vector<2x128xbf16>
    %c5 = arith.constant 5 : index
    %c0_31 = arith.constant 0 : index
    %c0_32 = arith.constant 0 : index
    %52 = vector.load %arg6[%c5, %c0_31, %c0_32] : memref<10x128x256xbf16, #tpu.memory_space<vmem>>, vector<1x128x256xbf16>
    %53 = vector.shape_cast %52 : vector<1x128x256xbf16> to vector<128x256xbf16>
    %cst_33 = arith.constant dense<0.000000e+00> : vector<2x256xf32>
    %54 = tpu.matmul %51, %53, %cst_33 {dimension_numbers = #tpu.dot_dimension_numbers<[1], [0], [0], [1], [0, 0, 1, 1], [], []>} : vector<2x128xbf16>, vector<128x256xbf16>, vector<2x256xf32> -> vector<2x256xf32>
    %55 = arith.addf %49, %54 : vector<2x256xf32>
    %56 = vector.extract_strided_slice %7 {offsets = [12, 0], sizes = [2, 128], strides = [1, 1]} : vector<20x128xf32> to vector<2x128xf32>
    %57 = arith.truncf %56 : vector<2x128xf32> to vector<2x128xbf16>
    %c6 = arith.constant 6 : index
    %c0_34 = arith.constant 0 : index
    %c0_35 = arith.constant 0 : index
    %58 = vector.load %arg6[%c6, %c0_34, %c0_35] : memref<10x128x256xbf16, #tpu.memory_space<vmem>>, vector<1x128x256xbf16>
    %59 = vector.shape_cast %58 : vector<1x128x256xbf16> to vector<128x256xbf16>
    %cst_36 = arith.constant dense<0.000000e+00> : vector<2x256xf32>
    %60 = tpu.matmul %57, %59, %cst_36 {dimension_numbers = #tpu.dot_dimension_numbers<[1], [0], [0], [1], [0, 0, 1, 1], [], []>} : vector<2x128xbf16>, vector<128x256xbf16>, vector<2x256xf32> -> vector<2x256xf32>
    %61 = arith.addf %55, %60 : vector<2x256xf32>
    %62 = vector.extract_strided_slice %7 {offsets = [14, 0], sizes = [2, 128], strides = [1, 1]} : vector<20x128xf32> to vector<2x128xf32>
    %63 = arith.truncf %62 : vector<2x128xf32> to vector<2x128xbf16>
    %c7 = arith.constant 7 : index
    %c0_37 = arith.constant 0 : index
    %c0_38 = arith.constant 0 : index
    %64 = vector.load %arg6[%c7, %c0_37, %c0_38] : memref<10x128x256xbf16, #tpu.memory_space<vmem>>, vector<1x128x256xbf16>
    %65 = vector.shape_cast %64 : vector<1x128x256xbf16> to vector<128x256xbf16>
    %cst_39 = arith.constant dense<0.000000e+00> : vector<2x256xf32>
    %66 = tpu.matmul %63, %65, %cst_39 {dimension_numbers = #tpu.dot_dimension_numbers<[1], [0], [0], [1], [0, 0, 1, 1], [], []>} : vector<2x128xbf16>, vector<128x256xbf16>, vector<2x256xf32> -> vector<2x256xf32>
    %67 = arith.addf %61, %66 : vector<2x256xf32>
    %68 = vector.extract_strided_slice %7 {offsets = [16, 0], sizes = [2, 128], strides = [1, 1]} : vector<20x128xf32> to vector<2x128xf32>
    %69 = arith.truncf %68 : vector<2x128xf32> to vector<2x128xbf16>
    %c8 = arith.constant 8 : index
    %c0_40 = arith.constant 0 : index
    %c0_41 = arith.constant 0 : index
    %70 = vector.load %arg6[%c8, %c0_40, %c0_41] : memref<10x128x256xbf16, #tpu.memory_space<vmem>>, vector<1x128x256xbf16>
    %71 = vector.shape_cast %70 : vector<1x128x256xbf16> to vector<128x256xbf16>
    %cst_42 = arith.constant dense<0.000000e+00> : vector<2x256xf32>
    %72 = tpu.matmul %69, %71, %cst_42 {dimension_numbers = #tpu.dot_dimension_numbers<[1], [0], [0], [1], [0, 0, 1, 1], [], []>} : vector<2x128xbf16>, vector<128x256xbf16>, vector<2x256xf32> -> vector<2x256xf32>
    %73 = arith.addf %67, %72 : vector<2x256xf32>
    %c0_43 = arith.constant 0 : index
    %c0_44 = arith.constant 0 : index
    %74 = vector.load %arg7[%c0_43, %c0_44] : memref<1x256xf32, #tpu.memory_space<vmem>>, vector<1x256xf32>
    %75 = vector.broadcast %74 : vector<1x256xf32> to vector<2x256xf32>
    %76 = arith.addf %73, %75 : vector<2x256xf32>
    %cst_45 = arith.constant 0.000000e+00 : f32
    %77 = vector.broadcast %cst_45 : f32 to vector<2x256xf32>
    %78 = arith.maximumf %76, %77 : vector<2x256xf32>
    %79 = arith.truncf %78 : vector<2x256xf32> to vector<2x256xbf16>
    %c0_46 = arith.constant 0 : index
    %c0_47 = arith.constant 0 : index
    %80 = vector.load %arg8[%c0_46, %c0_47] : memref<256x128xbf16, #tpu.memory_space<vmem>>, vector<256x128xbf16>
    %cst_48 = arith.constant dense<0.000000e+00> : vector<2x128xf32>
    %81 = tpu.matmul %79, %80, %cst_48 {dimension_numbers = #tpu.dot_dimension_numbers<[1], [0], [0], [1], [0, 0, 1, 1], [], []>} : vector<2x256xbf16>, vector<256x128xbf16>, vector<2x128xf32> -> vector<2x128xf32>
    %c0_49 = arith.constant 0 : index
    %c0_50 = arith.constant 0 : index
    %82 = vector.load %arg9[%c0_49, %c0_50] : memref<1x128xf32, #tpu.memory_space<vmem>>, vector<1x128xf32>
    %83 = vector.broadcast %82 : vector<1x128xf32> to vector<2x128xf32>
    %84 = arith.addf %81, %83 : vector<2x128xf32>
    %c0_51 = arith.constant 0 : index
    %c0_52 = arith.constant 0 : index
    %85 = vector.load %arg10[%c0_51, %c0_52] : memref<2x128xf32, #tpu.memory_space<vmem>>, vector<2x128xf32>
    tpu.vector_store %arg10[%c0_51, %c0_52], %84 {strides = array<i32>} : memref<2x128xf32, #tpu.memory_space<vmem>>, vector<2x128xf32>,
    return
  }
  func.func @transform_0(%arg0: i32) -> (i32, i32) {
    %c0_i32 = arith.constant 0 : i32
    %c0_i32_0 = arith.constant 0 : i32
    %c0_i32_1 = arith.constant 0 : i32
    return %c0_i32, %c0_i32_0 : i32, i32
  }
  func.func @transform_1(%arg0: i32) -> (i32, i32) {
    %c0_i32 = arith.constant 0 : i32
    %c0_i32_0 = arith.constant 0 : i32
    %c0_i32_1 = arith.constant 0 : i32
    return %c0_i32, %c0_i32_0 : i32, i32
  }
  func.func @transform_2(%arg0: i32) -> (i32, i32) {
    %c0_i32 = arith.constant 0 : i32
    %c0_i32_0 = arith.constant 0 : i32
    %c0_i32_1 = arith.constant 0 : i32
    return %c0_i32, %c0_i32_0 : i32, i32
  }
  func.func @transform_3(%arg0: i32) -> (i32, i32) {
    %c0_i32 = arith.constant 0 : i32
    %c0_i32_0 = arith.constant 0 : i32
    %c0_i32_1 = arith.constant 0 : i32
    return %c0_i32, %c0_i32_0 : i32, i32
  }
  func.func @transform_4(%arg0: i32) -> (i32, i32) {
    %c0_i32 = arith.constant 0 : i32
    %c0_i32_0 = arith.constant 0 : i32
    %c0_i32_1 = arith.constant 0 : i32
    return %c0_i32, %c0_i32_0 : i32, i32
  }
  func.func @transform_5(%arg0: i32) -> (i32, i32, i32) {
    %c0_i32 = arith.constant 0 : i32
    %c0_i32_0 = arith.constant 0 : i32
    %c0_i32_1 = arith.constant 0 : i32
    %c0_i32_2 = arith.constant 0 : i32
    return %c0_i32, %c0_i32_0, %c0_i32_1 : i32, i32, i32
  }
  func.func @transform_6(%arg0: i32) -> (i32, i32) {
    %c0_i32 = arith.constant 0 : i32
    %c0_i32_0 = arith.constant 0 : i32
    %c0_i32_1 = arith.constant 0 : i32
    return %c0_i32, %c0_i32_0 : i32, i32
  }
  func.func @transform_7(%arg0: i32) -> (i32, i32) {
    %c0_i32 = arith.constant 0 : i32
    %c0_i32_0 = arith.constant 0 : i32
    %c0_i32_1 = arith.constant 0 : i32
    return %c0_i32, %c0_i32_0 : i32, i32
  }
  func.func @transform_8(%arg0: i32) -> (i32, i32) {
    %c0_i32 = arith.constant 0 : i32
    %c0_i32_0 = arith.constant 0 : i32
    %c0_i32_1 = arith.constant 0 : i32
    return %c0_i32, %c0_i32_0 : i32, i32
  }
  func.func @transform_9(%arg0: i32) -> (i32, i32) {
    %c0_i32 = arith.constant 0 : i32
    %c0_i32_0 = arith.constant 0 : i32
    %c0_i32_1 = arith.constant 0 : i32
    return %c0_i32, %c0_i32_0 : i32, i32
  }
}

</mosaic_0001>

<llo_original>
// kernel: directnet_forward.1
$region0: #{directnet_forward.1}
  #allocation0 [shape = 'u32[]', space=smem, size = 0x4, offset = 0x4, fixed_abs, tag = 'smem constant byte address 0x4 - core index']
  #allocation1 [shape = 'u32[144,128]{1,0:T(1,128)}', space=vmem, size = 0x12000, scoped, tag = 'internal scratch']
  %s0 = inlined_call_operand.vmem [shape: bf16[20,256], index: 0, kind: input, shape index: {}]
  %s1 = inlined_call_operand.vmem [shape: bf16[256,128], index: 1, kind: input, shape index: {}]
  %s2 = inlined_call_operand.vmem [shape: f32[1,128], index: 2, kind: input, shape index: {}]
  %s3 = inlined_call_operand.vmem [shape: bf16[256,128], index: 3, kind: input, shape index: {}]
  %s4 = inlined_call_operand.vmem [shape: f32[1,128], index: 4, kind: input, shape index: {}]
  %s5 = inlined_call_operand.hbm [shape: bf16[10,128,256], index: 5, kind: input, shape index: {}]
  %s6 = inlined_call_operand.vmem [shape: f32[1,256], index: 6, kind: input, shape index: {}]
  %s7 = inlined_call_operand.vmem [shape: bf16[256,128], index: 7, kind: input, shape index: {}]
  %s8 = inlined_call_operand.vmem [shape: f32[1,128], index: 8, kind: input, shape index: {}]
  %s9 = inlined_call_operand.hbm [shape: f32[2,128], index: 9, kind: output, shape index: {}]
  %s10 = sld [smem:[#allocation0]]
  $region50: #{directnet_forward.1} parent=0
    _
  %s12 = ssub.s32 1, %s10
  %s13 = scalar_select 0, %s12, %s10
  $region1: #{directnet_forward.1} parent=0
    #allocation2 [shape = 'u8[655360]{0}', space=vmem, size = 0xa0000, scoped, tag = 'input window, operand 5, single buffered']
    #allocation3 [shape = 's32[1]{0}', space=sflag, size = 0x4, scoped, tag = 'scoped memory for directnet_forward.1']
    #allocation4 [shape = 's32[1]{0}', space=sflag, size = 0x4, scoped, tag = 'scoped memory for directnet_forward.1']
    #allocation5 [shape = 'u8[1024]{0}', space=vmem, size = 0x400, scoped, tag = 'output window, operand 0, single buffered']
    %14 = vsyncpa [#allocation3], 0
    %15 = vsyncpa [#allocation4], 0
    // Predicated region
    $region2: #{directnet_forward.1} parent=1 // pred_check
      _
    $region3: #{directnet_forward.1} parent=1 // pred_check_branch
      %17 = sbr.rel (0) target = $region5
    $region4: #{directnet_forward.1} parent=1 // pred_region
      _
    $region5: #{directnet_forward.1} parent=1 // pred_fallthru
      _
    // Predicated region
    $region6: #{directnet_forward.1} parent=1 // pred_check
      _
    $region7: #{directnet_forward.1} parent=1 // pred_check_branch
      %19 = sbr.rel (0) target = $region9
    $region8: #{directnet_forward.1} parent=1 // pred_region
      _
    $region9: #{directnet_forward.1} parent=1 // pred_fallthru
      _
    // Predicated region
    $region10: #{directnet_forward.1} parent=1 // pred_check
      _
    $region11: #{directnet_forward.1} parent=1 // pred_check_branch
      %21 = sbr.rel (0) target = $region13
    $region12: #{directnet_forward.1} parent=1 // pred_region
      _
    $region13: #{directnet_forward.1} parent=1 // pred_fallthru
      _
    // Predicated region
    $region14: #{directnet_forward.1} parent=1 // pred_check
      _
    $region15: #{directnet_forward.1} parent=1 // pred_check_branch
      %23 = sbr.rel (0) target = $region17
    $region16: #{directnet_forward.1} parent=1 // pred_region
      _
    $region17: #{directnet_forward.1} parent=1 // pred_fallthru
      _
    // Predicated region
    $region18: #{directnet_forward.1} parent=1 // pred_check
      _
    $region19: #{directnet_forward.1} parent=1 // pred_check_branch
      %25 = sbr.rel (0) target = $region21
    $region20: #{directnet_forward.1} parent=1 // pred_region
      _
    $region21: #{directnet_forward.1} parent=1 // pred_fallthru
      _
    // Predicated region
    $region22: #{directnet_forward.1} parent=1 // pred_check
      _
    $region23: #{directnet_forward.1} parent=1 // pred_check_branch
      %27 = sbr.rel (0) target = $region25
    $region24: #{directnet_forward.1} parent=1 // pred_region
      %s29 = ssub.s32 20480, 20480
      %30 = vsyncadd [#allocation3], %s29
      %s31 = sshll.u32 [#allocation2], 4
      %s32 = int_to_ptr.vmem [resolvable:$true] %s31
      %37 = dma.hbm_to_vmem [thread:$0]  %s5, 20480, %s32, [#allocation3], 128, 128, 8
    $region25: #{directnet_forward.1} parent=1 // pred_fallthru
      _
    // Predicated region
    $region26: #{directnet_forward.1} parent=1 // pred_check
      _
    $region27: #{directnet_forward.1} parent=1 // pred_check_branch
      %39 = sbr.rel (0) target = $region29
    $region28: #{directnet_forward.1} parent=1 // pred_region
      _
    $region29: #{directnet_forward.1} parent=1 // pred_fallthru
      _
    // Predicated region
    $region30: #{directnet_forward.1} parent=1 // pred_check
      _
    $region31: #{directnet_forward.1} parent=1 // pred_check_branch
      %41 = sbr.rel (0) target = $region33
    $region32: #{directnet_forward.1} parent=1 // pred_region
      _
    $region33: #{directnet_forward.1} parent=1 // pred_fallthru
      _
    // Predicated region
    $region34: #{directnet_forward.1} parent=1 // pred_check
      _
    $region35: #{directnet_forward.1} parent=1 // pred_check_branch
      %43 = sbr.rel (0) target = $region37
    $region36: #{directnet_forward.1} parent=1 // pred_region
      _
    $region37: #{directnet_forward.1} parent=1 // pred_fallthru
      _
    // Predicated region
    $region38: #{directnet_forward.1} parent=1 // pred_check
      _
    $region39: #{directnet_forward.1} parent=1 // pred_check_branch
      %45 = sbr.rel (0) target = $region41
    $region40: #{directnet_forward.1} parent=1 // pred_region
      %46 = dma.done [#allocation3], 20480
    $region41: #{directnet_forward.1} parent=1 // pred_fallthru
      _
    %v48 = vld [vmem:[%s0] sm:$0xff]
    %v49 = vld [vmem:[%s0 + $0x8] sm:$0xff]
    %v50 = vld [vmem:[%s0 + $0x10] sm:$0x33]
    %v51 = vld [vmem:[%s1] sm:$0xf]
    %v52 = vld [vmem:[%s1 + $0x4] sm:$0xf]
    %v53 = vld [vmem:[%s1 + $0x8] sm:$0xf]
    %v54 = vld [vmem:[%s1 + $0xc] sm:$0xf]
    %v55 = vld [vmem:[%s1 + $0x10] sm:$0xf]
    %v56 = vld [vmem:[%s1 + $0x14] sm:$0xf]
    %v57 = vld [vmem:[%s1 + $0x18] sm:$0xf]
    %v58 = vld [vmem:[%s1 + $0x1c] sm:$0xf]
    %v59 = vld [vmem:[%s1 + $0x20] sm:$0xf]
    %v60 = vld [vmem:[%s1 + $0x24] sm:$0xf]
    %v61 = vld [vmem:[%s1 + $0x28] sm:$0xf]
    %v62 = vld [vmem:[%s1 + $0x2c] sm:$0xf]
    %v63 = vld [vmem:[%s1 + $0x30] sm:$0xf]
    %v64 = vld [vmem:[%s1 + $0x34] sm:$0xf]
    %v65 = vld [vmem:[%s1 + $0x38] sm:$0xf]
    %v66 = vld [vmem:[%s1 + $0x3c] sm:$0xf]
    %v67 = vld [vmem:[%s1 + $0x40] sm:$0xf]
    %v68 = vld [vmem:[%s1 + $0x44] sm:$0xf]
    %v69 = vld [vmem:[%s1 + $0x48] sm:$0xf]
    %v70 = vld [vmem:[%s1 + $0x4c] sm:$0xf]
    %v71 = vld [vmem:[%s1 + $0x50] sm:$0xf]
    %v72 = vld [vmem:[%s1 + $0x54] sm:$0xf]
    %v73 = vld [vmem:[%s1 + $0x58] sm:$0xf]
    %v74 = vld [vmem:[%s1 + $0x5c] sm:$0xf]
    %v75 = vld [vmem:[%s1 + $0x60] sm:$0xf]
    %v76 = vld [vmem:[%s1 + $0x64] sm:$0xf]
    %v77 = vld [vmem:[%s1 + $0x68] sm:$0xf]
    %v78 = vld [vmem:[%s1 + $0x6c] sm:$0xf]
    %v79 = vld [vmem:[%s1 + $0x70] sm:$0xf]
    %v80 = vld [vmem:[%s1 + $0x74] sm:$0xf]
    %v81 = vld [vmem:[%s1 + $0x78] sm:$0xf]
    %v82 = vld [vmem:[%s1 + $0x7c] sm:$0xf]
    %v83 = vld [vmem:[%s2] sm:$0x1]
    %v85 = vlaneseq
    %v86 = vshrl.u32 %v85, 7
    %v87 = vsub.s32 0, %v86
    %v88 = vrot.slane %v83, %v87
    %v93 = vunpack.c.l.b16 %v48
    %v94 = vunpack.c.h.b16 %v48
    %v95 = vunpack.c.l.b16 %v49
    %v96 = vunpack.c.h.b16 %v49
    %v97 = vunpack.c.l.b16 %v50
    %v98 = vunpack.c.h.b16 %v50
    %v99 = vpack.c.b16 %v95, %v93
    %v100 = vpack.c.b16 %v96, %v94
    %v101 = vpack.c.b16 %v97, %v97
    %v102 = vpack.c.b16 %v98, %v98
    %v139 = vunpack.c.l.b16 %v51
    %v140 = vunpack.c.l.b16 %v52
    %v141 = vunpack.c.l.b16 %v53
    %v142 = vunpack.c.l.b16 %v54
    %v143 = vunpack.c.l.b16 %v55
    %v144 = vunpack.c.l.b16 %v56
    %v145 = vunpack.c.l.b16 %v57
    %v146 = vunpack.c.l.b16 %v58
    %v147 = vunpack.c.l.b16 %v59
    %v148 = vunpack.c.l.b16 %v60
    %v149 = vunpack.c.l.b16 %v61
    %v150 = vunpack.c.l.b16 %v62
    %v151 = vunpack.c.l.b16 %v63
    %v152 = vunpack.c.l.b16 %v64
    %v153 = vunpack.c.l.b16 %v65
    %v154 = vunpack.c.l.b16 %v66
    %v155 = vunpack.c.l.b16 %v67
    %v156 = vunpack.c.l.b16 %v68
    %v157 = vunpack.c.l.b16 %v69
    %v158 = vunpack.c.l.b16 %v70
    %v159 = vunpack.c.l.b16 %v71
    %v160 = vunpack.c.l.b16 %v72
    %v161 = vunpack.c.l.b16 %v73
    %v162 = vunpack.c.l.b16 %v74
    %v163 = vunpack.c.l.b16 %v75
    %v164 = vunpack.c.l.b16 %v76
    %v165 = vunpack.c.l.b16 %v77
    %v166 = vunpack.c.l.b16 %v78
    %v167 = vunpack.c.l.b16 %v79
    %v168 = vunpack.c.l.b16 %v80
    %v169 = vunpack.c.l.b16 %v81
    %v170 = vunpack.c.l.b16 %v82
    %v171 = vpack.c.b16 %v140, %v139
    %v172 = vpack.c.b16 %v142, %v141
    %v173 = vpack.c.b16 %v144, %v143
    %v174 = vpack.c.b16 %v146, %v145
    %v175 = vpack.c.b16 %v148, %v147
    %v176 = vpack.c.b16 %v150, %v149
    %v177 = vpack.c.b16 %v152, %v151
    %v178 = vpack.c.b16 %v154, %v153
    %v179 = vpack.c.b16 %v156, %v155
    %v180 = vpack.c.b16 %v158, %v157
    %v181 = vpack.c.b16 %v160, %v159
    %v182 = vpack.c.b16 %v162, %v161
    %v183 = vpack.c.b16 %v164, %v163
    %v184 = vpack.c.b16 %v166, %v165
    %v185 = vpack.c.b16 %v168, %v167
    %v186 = vpack.c.b16 %v170, %v169
    %203 = vmatprep.subr.bf16.mxu0 0
    %204 = vmatpush1.bf16.msra.mxu0 %v171
    %205 = vmatprep.subr.bf16.mxu0 0
    %206 = vmatpush1.bf16.msra.mxu0 %v172
    %207 = vmatprep.subr.bf16.mxu0 0
    %208 = vmatpush1.bf16.msra.mxu0 %v173
    %209 = vmatprep.subr.bf16.mxu0 0
    %210 = vmatpush1.bf16.msra.mxu0 %v174
    %211 = vmatprep.subr.bf16.mxu0 0
    %212 = vmatpush1.bf16.msra.mxu0 %v175
    %213 = vmatprep.subr.bf16.mxu0 0
    %214 = vmatpush1.bf16.msra.mxu0 %v176
    %215 = vmatprep.subr.bf16.mxu0 0
    %216 = vmatpush1.bf16.msra.mxu0 %v177
    %217 = vmatprep.subr.bf16.mxu0 0
    %218 = vmatpush1.bf16.msra.mxu0 %v178
    %219 = vmatprep.subr.bf16.mxu0 0
    %220 = vmatpush1.bf16.msra.mxu0 %v179
    %221 = vmatprep.subr.bf16.mxu0 0
    %222 = vmatpush1.bf16.msra.mxu0 %v180
    %223 = vmatprep.subr.bf16.mxu0 0
    %224 = vmatpush1.bf16.msra.mxu0 %v181
    %225 = vmatprep.subr.bf16.mxu0 0
    %226 = vmatpush1.bf16.msra.mxu0 %v182
    %227 = vmatprep.subr.bf16.mxu0 0
    %228 = vmatpush1.bf16.msra.mxu0 %v183
    %229 = vmatprep.subr.bf16.mxu0 0
    %230 = vmatpush1.bf16.msra.mxu0 %v184
    %231 = vmatprep.subr.bf16.mxu0 0
    %232 = vmatpush1.bf16.msra.mxu0 %v185
    %233 = vmatprep.subr.bf16.mxu0 0
    %234 = vmatpush1.bf16.msra.mxu0 %v186
    %235 = vmatprep.mubr.bf16.mxu0 %v100
    %236 = vmatmul.mubr.bf16.gmra.mrb[0].mxu0 %v99
    %v237 = vpop.f32.mrb[0].mxu0
    %v238 = vadd.f32 %v88, %v237
    %v239 = vpop.f32.mrb[0].mxu0
    %v240 = vpop.f32.mrb[0].mxu0
    %v241 = vadd.f32 %v88, %v240
    %v242 = vpop.f32.mrb[0].mxu0
    %243 = vmatprep.mubr.bf16.mxu0 %v102
    %244 = vmatmul.mubr.bf16.gmra.mrb[0].mxu0 %v101
    %v245 = vpop.f32.mrb[0].mxu0
    %v246 = vadd.f32 %v88, %v245
    %v247 = vpop.f32.mrb[0].mxu0
    %v248 = vpop.f32.mrb[0].mxu0
    %v249 = vpop.f32.mrb[0].mxu0
    %250 = vdwg.mxu0
    %v251 = vmax.f32 %v238, 0.0
    %v252 = vmax.f32 %v241, 0.0
    %v253 = vmax.f32 %v246, 0.0
    %v254 = vld [vmem:[%s3] sm:$0xf]
    %v255 = vld [vmem:[%s3 + $0x4] sm:$0xf]
    %v256 = vld [vmem:[%s3 + $0x8] sm:$0xf]
    %v257 = vld [vmem:[%s3 + $0xc] sm:$0xf]
    %v258 = vld [vmem:[%s3 + $0x10] sm:$0xf]
    %v259 = vld [vmem:[%s3 + $0x14] sm:$0xf]
    %v260 = vld [vmem:[%s3 + $0x18] sm:$0xf]
    %v261 = vld [vmem:[%s3 + $0x1c] sm:$0xf]
    %v262 = vld [vmem:[%s3 + $0x20] sm:$0xf]
    %v263 = vld [vmem:[%s3 + $0x24] sm:$0xf]
    %v264 = vld [vmem:[%s3 + $0x28] sm:$0xf]
    %v265 = vld [vmem:[%s3 + $0x2c] sm:$0xf]
    %v266 = vld [vmem:[%s3 + $0x30] sm:$0xf]
    %v267 = vld [vmem:[%s3 + $0x34] sm:$0xf]
    %v268 = vld [vmem:[%s3 + $0x38] sm:$0xf]
    %v269 = vld [vmem:[%s3 + $0x3c] sm:$0xf]
    %v270 = vld [vmem:[%s3 + $0x40] sm:$0xf]
    %v271 = vld [vmem:[%s3 + $0x44] sm:$0xf]
    %v272 = vld [vmem:[%s3 + $0x48] sm:$0xf]
    %v273 = vld [vmem:[%s3 + $0x4c] sm:$0xf]
    %v274 = vld [vmem:[%s3 + $0x50] sm:$0xf]
    %v275 = vld [vmem:[%s3 + $0x54] sm:$0xf]
    %v276 = vld [vmem:[%s3 + $0x58] sm:$0xf]
    %v277 = vld [vmem:[%s3 + $0x5c] sm:$0xf]
    %v278 = vld [vmem:[%s3 + $0x60] sm:$0xf]
    %v279 = vld [vmem:[%s3 + $0x64] sm:$0xf]
    %v280 = vld [vmem:[%s3 + $0x68] sm:$0xf]
    %v281 = vld [vmem:[%s3 + $0x6c] sm:$0xf]
    %v282 = vld [vmem:[%s3 + $0x70] sm:$0xf]
    %v283 = vld [vmem:[%s3 + $0x74] sm:$0xf]
    %v284 = vld [vmem:[%s3 + $0x78] sm:$0xf]
    %v285 = vld [vmem:[%s3 + $0x7c] sm:$0xf]
    %v286 = vld [vmem:[%s4] sm:$0x1]
    %v288 = vlaneseq
    %v289 = vshrl.u32 %v288, 7
    %v290 = vsub.s32 0, %v289
    %v291 = vrot.slane %v286, %v290
    %v293 = vrot.slane %v101, 1
    %v294 = vrot.slane %v102, 1
    %v329 = vunpack.c.l.b16 %v254
    %v330 = vunpack.c.l.b16 %v255
    %v331 = vunpack.c.l.b16 %v256
    %v332 = vunpack.c.l.b16 %v257
    %v333 = vunpack.c.l.b16 %v258
    %v334 = vunpack.c.l.b16 %v259
    %v335 = vunpack.c.l.b16 %v260
    %v336 = vunpack.c.l.b16 %v261
    %v337 = vunpack.c.l.b16 %v262
    %v338 = vunpack.c.l.b16 %v263
    %v339 = vunpack.c.l.b16 %v264
    %v340 = vunpack.c.l.b16 %v265
    %v341 = vunpack.c.l.b16 %v266
    %v342 = vunpack.c.l.b16 %v267
    %v343 = vunpack.c.l.b16 %v268
    %v344 = vunpack.c.l.b16 %v269
    %v345 = vunpack.c.l.b16 %v270
    %v346 = vunpack.c.l.b16 %v271
    %v347 = vunpack.c.l.b16 %v272
    %v348 = vunpack.c.l.b16 %v273
    %v349 = vunpack.c.l.b16 %v274
    %v350 = vunpack.c.l.b16 %v275
    %v351 = vunpack.c.l.b16 %v276
    %v352 = vunpack.c.l.b16 %v277
    %v353 = vunpack.c.l.b16 %v278
    %v354 = vunpack.c.l.b16 %v279
    %v355 = vunpack.c.l.b16 %v280
    %v356 = vunpack.c.l.b16 %v281
    %v357 = vunpack.c.l.b16 %v282
    %v358 = vunpack.c.l.b16 %v283
    %v359 = vunpack.c.l.b16 %v284
    %v360 = vunpack.c.l.b16 %v285
    %v361 = vpack.c.b16 %v330, %v329
    %v362 = vpack.c.b16 %v332, %v331
    %v363 = vpack.c.b16 %v334, %v333
    %v364 = vpack.c.b16 %v336, %v335
    %v365 = vpack.c.b16 %v338, %v337
    %v366 = vpack.c.b16 %v340, %v339
    %v367 = vpack.c.b16 %v342, %v341
    %v368 = vpack.c.b16 %v344, %v343
    %v369 = vpack.c.b16 %v346, %v345
    %v370 = vpack.c.b16 %v348, %v347
    %v371 = vpack.c.b16 %v350, %v349
    %v372 = vpack.c.b16 %v352, %v351
    %v373 = vpack.c.b16 %v354, %v353
    %v374 = vpack.c.b16 %v356, %v355
    %v375 = vpack.c.b16 %v358, %v357
    %v376 = vpack.c.b16 %v360, %v359
    %393 = vmatprep.subr.bf16.mxu0 0
    %394 = vmatpush1.bf16.msra.mxu0 %v361
    %395 = vmatprep.subr.bf16.mxu0 0
    %396 = vmatpush1.bf16.msra.mxu0 %v362
    %397 = vmatprep.subr.bf16.mxu0 0
    %398 = vmatpush1.bf16.msra.mxu0 %v363
    %399 = vmatprep.subr.bf16.mxu0 0
    %400 = vmatpush1.bf16.msra.mxu0 %v364
    %401 = vmatprep.subr.bf16.mxu0 0
    %402 = vmatpush1.bf16.msra.mxu0 %v365
    %403 = vmatprep.subr.bf16.mxu0 0
    %404 = vmatpush1.bf16.msra.mxu0 %v366
    %405 = vmatprep.subr.bf16.mxu0 0
    %406 = vmatpush1.bf16.msra.mxu0 %v367
    %407 = vmatprep.subr.bf16.mxu0 0
    %408 = vmatpush1.bf16.msra.mxu0 %v368
    %409 = vmatprep.subr.bf16.mxu0 0
    %410 = vmatpush1.bf16.msra.mxu0 %v369
    %411 = vmatprep.subr.bf16.mxu0 0
    %412 = vmatpush1.bf16.msra.mxu0 %v370
    %413 = vmatprep.subr.bf16.mxu0 0
    %414 = vmatpush1.bf16.msra.mxu0 %v371
    %415 = vmatprep.subr.bf16.mxu0 0
    %416 = vmatpush1.bf16.msra.mxu0 %v372
    %417 = vmatprep.subr.bf16.mxu0 0
    %418 = vmatpush1.bf16.msra.mxu0 %v373
    %419 = vmatprep.subr.bf16.mxu0 0
    %420 = vmatpush1.bf16.msra.mxu0 %v374
    %421 = vmatprep.subr.bf16.mxu0 0
    %422 = vmatpush1.bf16.msra.mxu0 %v375
    %423 = vmatprep.subr.bf16.mxu0 0
    %424 = vmatpush1.bf16.msra.mxu0 %v376
    %425 = vmatprep.mubr.bf16.mxu0 %v294
    %426 = vmatmul.mubr.bf16.gmra.mrb[0].mxu0 %v293
    %v427 = vpop.f32.mrb[0].mxu0
    %v428 = vadd.f32 %v291, %v427
    %v429 = vpop.f32.mrb[0].mxu0
    %v430 = vpop.f32.mrb[0].mxu0
    %v431 = vpop.f32.mrb[0].mxu0
    %432 = vdwg.mxu0
    %v433 = vmax.f32 %v428, 0.0
    %v434 = vpack.c.bf16 %v433, %v433
    %s435 = scalar_lea.vmem [#allocation2], 1152
    %v436 = vld [vmem:[%s435] sm:$0xff]
    %v437 = vld [vmem:[%s435 + $0x8] sm:$0xff]
    %v438 = vld [vmem:[%s435 + $0x10] sm:$0xff]
    %v439 = vld [vmem:[%s435 + $0x18] sm:$0xff]
    %v440 = vld [vmem:[%s435 + $0x20] sm:$0xff]
    %v441 = vld [vmem:[%s435 + $0x28] sm:$0xff]
    %v442 = vld [vmem:[%s435 + $0x30] sm:$0xff]
    %v443 = vld [vmem:[%s435 + $0x38] sm:$0xff]
    %v444 = vld [vmem:[%s435 + $0x40] sm:$0xff]
    %v445 = vld [vmem:[%s435 + $0x48] sm:$0xff]
    %v446 = vld [vmem:[%s435 + $0x50] sm:$0xff]
    %v447 = vld [vmem:[%s435 + $0x58] sm:$0xff]
    %v448 = vld [vmem:[%s435 + $0x60] sm:$0xff]
    %v449 = vld [vmem:[%s435 + $0x68] sm:$0xff]
    %v450 = vld [vmem:[%s435 + $0x70] sm:$0xff]
    %v451 = vld [vmem:[%s435 + $0x78] sm:$0xff]
    %v452 = vpack.c.bf16 %v251, %v251
    %v453 = vld [vmem:[#allocation2] sm:$0xff]
    %v454 = vld [vmem:[#allocation2 + $0x8] sm:$0xff]
    %v455 = vld [vmem:[#allocation2 + $0x10] sm:$0xff]
    %v456 = vld [vmem:[#allocation2 + $0x18] sm:$0xff]
    %v457 = vld [vmem:[#allocation2 + $0x20] sm:$0xff]
    %v458 = vld [vmem:[#allocation2 + $0x28] sm:$0xff]
    %v459 = vld [vmem:[#allocation2 + $0x30] sm:$0xff]
    %v460 = vld [vmem:[#allocation2 + $0x38] sm:$0xff]
    %v461 = vld [vmem:[#allocation2 + $0x40] sm:$0xff]
    %v462 = vld [vmem:[#allocation2 + $0x48] sm:$0xff]
    %v463 = vld [vmem:[#allocation2 + $0x50] sm:$0xff]
    %v464 = vld [vmem:[#allocation2 + $0x58] sm:$0xff]
    %v465 = vld [vmem:[#allocation2 + $0x60] sm:$0xff]
    %v466 = vld [vmem:[#allocation2 + $0x68] sm:$0xff]
    %v467 = vld [vmem:[#allocation2 + $0x70] sm:$0xff]
    %v468 = vld [vmem:[#allocation2 + $0x78] sm:$0xff]
    %v485 = vunpack.c.l.b16 %v453
    %v486 = vunpack.c.h.b16 %v453
    %v487 = vunpack.c.l.b16 %v454
    %v488 = vunpack.c.h.b16 %v454
    %v489 = vunpack.c.l.b16 %v455
    %v490 = vunpack.c.h.b16 %v455
    %v491 = vunpack.c.l.b16 %v456
    %v492 = vunpack.c.h.b16 %v456
    %v493 = vunpack.c.l.b16 %v457
    %v494 = vunpack.c.h.b16 %v457
    %v495 = vunpack.c.l.b16 %v458
    %v496 = vunpack.c.h.b16 %v458
    %v497 = vunpack.c.l.b16 %v459
    %v498 = vunpack.c.h.b16 %v459
    %v499 = vunpack.c.l.b16 %v460
    %v500 = vunpack.c.h.b16 %v460
    %v501 = vunpack.c.l.b16 %v461
    %v502 = vunpack.c.h.b16 %v461
    %v503 = vunpack.c.l.b16 %v462
    %v504 = vunpack.c.h.b16 %v462
    %v505 = vunpack.c.l.b16 %v463
    %v506 = vunpack.c.h.b16 %v463
    %v507 = vunpack.c.l.b16 %v464
    %v508 = vunpack.c.h.b16 %v464
    %v509 = vunpack.c.l.b16 %v465
    %v510 = vunpack.c.h.b16 %v465
    %v511 = vunpack.c.l.b16 %v466
    %v512 = vunpack.c.h.b16 %v466
    %v513 = vunpack.c.l.b16 %v467
    %v514 = vunpack.c.h.b16 %v467
    %v515 = vunpack.c.l.b16 %v468
    %v516 = vunpack.c.h.b16 %v468
    %v517 = vpack.c.b16 %v487, %v485
    %v518 = vpack.c.b16 %v488, %v486
    %v519 = vpack.c.b16 %v491, %v489
    %v520 = vpack.c.b16 %v492, %v490
    %v521 = vpack.c.b16 %v495, %v493
    %v522 = vpack.c.b16 %v496, %v494
    %v523 = vpack.c.b16 %v499, %v497
    %v524 = vpack.c.b16 %v500, %v498
    %v525 = vpack.c.b16 %v503, %v501
    %v526 = vpack.c.b16 %v504, %v502
    %v527 = vpack.c.b16 %v507, %v505
    %v528 = vpack.c.b16 %v508, %v506
    %v529 = vpack.c.b16 %v511, %v509
    %v530 = vpack.c.b16 %v512, %v510
    %v531 = vpack.c.b16 %v515, %v513
    %v532 = vpack.c.b16 %v516, %v514
    %549 = vmatprep.subr.bf16.mxu0 %v518
    %550 = vmatpush1.bf16.msra.mxu0 %v517
    %551 = vmatprep.subr.bf16.mxu0 %v520
    %552 = vmatpush1.bf16.msra.mxu0 %v519
    %553 = vmatprep.subr.bf16.mxu0 %v522
    %554 = vmatpush1.bf16.msra.mxu0 %v521
    %555 = vmatprep.subr.bf16.mxu0 %v524
    %556 = vmatpush1.bf16.msra.mxu0 %v523
    %557 = vmatprep.subr.bf16.mxu0 %v526
    %558 = vmatpush1.bf16.msra.mxu0 %v525
    %559 = vmatprep.subr.bf16.mxu0 %v528
    %560 = vmatpush1.bf16.msra.mxu0 %v527
    %561 = vmatprep.subr.bf16.mxu0 %v530
    %562 = vmatpush1.bf16.msra.mxu0 %v529
    %563 = vmatprep.subr.bf16.mxu0 %v532
    %564 = vmatpush1.bf16.msra.mxu0 %v531
    %565 = vmatprep.subr.bf16.mxu0 0
    %566 = vmatpush1.bf16.msra.mxu0 0
    %567 = vmatprep.subr.bf16.mxu0 0
    %568 = vmatpush1.bf16.msra.mxu0 0
    %569 = vmatprep.subr.bf16.mxu0 0
    %570 = vmatpush1.bf16.msra.mxu0 0
    %571 = vmatprep.subr.bf16.mxu0 0
    %572 = vmatpush1.bf16.msra.mxu0 0
    %573 = vmatprep.subr.bf16.mxu0 0
    %574 = vmatpush1.bf16.msra.mxu0 0
    %575 = vmatprep.subr.bf16.mxu0 0
    %576 = vmatpush1.bf16.msra.mxu0 0
    %577 = vmatprep.subr.bf16.mxu0 0
    %578 = vmatpush1.bf16.msra.mxu0 0
    %579 = vmatprep.subr.bf16.mxu0 0
    %580 = vmatpush1.bf16.msra.mxu0 0
    %581 = vmatprep.mubr.bf16.mxu0 0
    %582 = vmatmul.mubr.bf16.gmra.mrb[0].mxu0 %v452
    %v583 = vpop.f32.mrb[0].mxu0
    %v584 = vadd.f32 0.0, %v583
    %v585 = vpop.f32.mrb[0].mxu0
    %v586 = vadd.f32 0.0, %v585
    %v587 = vpop.f32.mrb[0].mxu0
    %v588 = vpop.f32.mrb[0].mxu0
    %589 = vdwg.mxu0
    %v606 = vunpack.c.l.b16 %v436
    %v607 = vunpack.c.h.b16 %v436
    %v608 = vunpack.c.l.b16 %v437
    %v609 = vunpack.c.h.b16 %v437
    %v610 = vunpack.c.l.b16 %v438
    %v611 = vunpack.c.h.b16 %v438
    %v612 = vunpack.c.l.b16 %v439
    %v613 = vunpack.c.h.b16 %v439
    %v614 = vunpack.c.l.b16 %v440
    %v615 = vunpack.c.h.b16 %v440
    %v616 = vunpack.c.l.b16 %v441
    %v617 = vunpack.c.h.b16 %v441
    %v618 = vunpack.c.l.b16 %v442
    %v619 = vunpack.c.h.b16 %v442
    %v620 = vunpack.c.l.b16 %v443
    %v621 = vunpack.c.h.b16 %v443
    %v622 = vunpack.c.l.b16 %v444
    %v623 = vunpack.c.h.b16 %v444
    %v624 = vunpack.c.l.b16 %v445
    %v625 = vunpack.c.h.b16 %v445
    %v626 = vunpack.c.l.b16 %v446
    %v627 = vunpack.c.h.b16 %v446
    %v628 = vunpack.c.l.b16 %v447
    %v629 = vunpack.c.h.b16 %v447
    %v630 = vunpack.c.l.b16 %v448
    %v631 = vunpack.c.h.b16 %v448
    %v632 = vunpack.c.l.b16 %v449
    %v633 = vunpack.c.h.b16 %v449
    %v634 = vunpack.c.l.b16 %v450
    %v635 = vunpack.c.h.b16 %v450
    %v636 = vunpack.c.l.b16 %v451
    %v637 = vunpack.c.h.b16 %v451
    %v638 = vpack.c.b16 %v608, %v606
    %v639 = vpack.c.b16 %v609, %v607
    %v640 = vpack.c.b16 %v612, %v610
    %v641 = vpack.c.b16 %v613, %v611
    %v642 = vpack.c.b16 %v616, %v614
    %v643 = vpack.c.b16 %v617, %v615
    %v644 = vpack.c.b16 %v620, %v618
    %v645 = vpack.c.b16 %v621, %v619
    %v646 = vpack.c.b16 %v624, %v622
    %v647 = vpack.c.b16 %v625, %v623
    %v648 = vpack.c.b16 %v628, %v626
    %v649 = vpack.c.b16 %v629, %v627
    %v650 = vpack.c.b16 %v632, %v630
    %v651 = vpack.c.b16 %v633, %v631
    %v652 = vpack.c.b16 %v636, %v634
    %v653 = vpack.c.b16 %v637, %v635
    %670 = vmatprep.subr.bf16.mxu0 %v639
    %671 = vmatpush1.bf16.msra.mxu0 %v638
    %672 = vmatprep.subr.bf16.mxu0 %v641
    %673 = vmatpush1.bf16.msra.mxu0 %v640
    %674 = vmatprep.subr.bf16.mxu0 %v643
    %675 = vmatpush1.bf16.msra.mxu0 %v642
    %676 = vmatprep.subr.bf16.mxu0 %v645
    %677 = vmatpush1.bf16.msra.mxu0 %v644
    %678 = vmatprep.subr.bf16.mxu0 %v647
    %679 = vmatpush1.bf16.msra.mxu0 %v646
    %680 = vmatprep.subr.bf16.mxu0 %v649
    %681 = vmatpush1.bf16.msra.mxu0 %v648
    %682 = vmatprep.subr.bf16.mxu0 %v651
    %683 = vmatpush1.bf16.msra.mxu0 %v650
    %684 = vmatprep.subr.bf16.mxu0 %v653
    %685 = vmatpush1.bf16.msra.mxu0 %v652
    %686 = vmatprep.subr.bf16.mxu0 0
    %687 = vmatpush1.bf16.msra.mxu0 0
    %688 = vmatprep.subr.bf16.mxu0 0
    %689 = vmatpush1.bf16.msra.mxu0 0
    %690 = vmatprep.subr.bf16.mxu0 0
    %691 = vmatpush1.bf16.msra.mxu0 0
    %692 = vmatprep.subr.bf16.mxu0 0
    %693 = vmatpush1.bf16.msra.mxu0 0
    %694 = vmatprep.subr.bf16.mxu0 0
    %695 = vmatpush1.bf16.msra.mxu0 0
    %696 = vmatprep.subr.bf16.mxu0 0
    %697 = vmatpush1.bf16.msra.mxu0 0
    %698 = vmatprep.subr.bf16.mxu0 0
    %699 = vmatpush1.bf16.msra.mxu0 0
    %700 = vmatprep.subr.bf16.mxu0 0
    %701 = vmatpush1.bf16.msra.mxu0 0
    %702 = vmatprep.mubr.bf16.mxu0 0
    %703 = vmatmul.mubr.bf16.gmra.mrb[0].mxu0 %v434
    %v704 = vpop.f32.mrb[0].mxu0
    %v705 = vadd.f32 %v584, %v704
    %v706 = vpop.f32.mrb[0].mxu0
    %v707 = vadd.f32 %v586, %v706
    %v708 = vpop.f32.mrb[0].mxu0
    %v709 = vpop.f32.mrb[0].mxu0
    %710 = vdwg.mxu0
    %s711 = scalar_lea.vmem [#allocation2], 128
    %v712 = vld [vmem:[%s711] sm:$0xff]
    %v713 = vld [vmem:[%s711 + $0x8] sm:$0xff]
    %v714 = vld [vmem:[%s711 + $0x10] sm:$0xff]
    %v715 = vld [vmem:[%s711 + $0x18] sm:$0xff]
    %v716 = vld [vmem:[%s711 + $0x20] sm:$0xff]
    %v717 = vld [vmem:[%s711 + $0x28] sm:$0xff]
    %v718 = vld [vmem:[%s711 + $0x30] sm:$0xff]
    %v719 = vld [vmem:[%s711 + $0x38] sm:$0xff]
    %v720 = vld [vmem:[%s711 + $0x40] sm:$0xff]
    %v721 = vld [vmem:[%s711 + $0x48] sm:$0xff]
    %v722 = vld [vmem:[%s711 + $0x50] sm:$0xff]
    %v723 = vld [vmem:[%s711 + $0x58] sm:$0xff]
    %v724 = vld [vmem:[%s711 + $0x60] sm:$0xff]
    %v725 = vld [vmem:[%s711 + $0x68] sm:$0xff]
    %v726 = vld [vmem:[%s711 + $0x70] sm:$0xff]
    %v727 = vld [vmem:[%s711 + $0x78] sm:$0xff]
    %v729 = vrot.slane %v452, 1
    %v747 = vunpack.c.l.b16 %v712
    %v748 = vunpack.c.h.b16 %v712
    %v749 = vunpack.c.l.b16 %v713
    %v750 = vunpack.c.h.b16 %v713
    %v751 = vunpack.c.l.b16 %v714
    %v752 = vunpack.c.h.b16 %v714
    %v753 = vunpack.c.l.b16 %v715
    %v754 = vunpack.c.h.b16 %v715
    %v755 = vunpack.c.l.b16 %v716
    %v756 = vunpack.c.h.b16 %v716
    %v757 = vunpack.c.l.b16 %v717
    %v758 = vunpack.c.h.b16 %v717
    %v759 = vunpack.c.l.b16 %v718
    %v760 = vunpack.c.h.b16 %v718
    %v761 = vunpack.c.l.b16 %v719
    %v762 = vunpack.c.h.b16 %v719
    %v763 = vunpack.c.l.b16 %v720
    %v764 = vunpack.c.h.b16 %v720
    %v765 = vunpack.c.l.b16 %v721
    %v766 = vunpack.c.h.b16 %v721
    %v767 = vunpack.c.l.b16 %v722
    %v768 = vunpack.c.h.b16 %v722
    %v769 = vunpack.c.l.b16 %v723
    %v770 = vunpack.c.h.b16 %v723
    %v771 = vunpack.c.l.b16 %v724
    %v772 = vunpack.c.h.b16 %v724
    %v773 = vunpack.c.l.b16 %v725
    %v774 = vunpack.c.h.b16 %v725
    %v775 = vunpack.c.l.b16 %v726
    %v776 = vunpack.c.h.b16 %v726
    %v777 = vunpack.c.l.b16 %v727
    %v778 = vunpack.c.h.b16 %v727
    %v779 = vpack.c.b16 %v749, %v747
    %v780 = vpack.c.b16 %v750, %v748
    %v781 = vpack.c.b16 %v753, %v751
    %v782 = vpack.c.b16 %v754, %v752
    %v783 = vpack.c.b16 %v757, %v755
    %v784 = vpack.c.b16 %v758, %v756
    %v785 = vpack.c.b16 %v761, %v759
    %v786 = vpack.c.b16 %v762, %v760
    %v787 = vpack.c.b16 %v765, %v763
    %v788 = vpack.c.b16 %v766, %v764
    %v789 = vpack.c.b16 %v769, %v767
    %v790 = vpack.c.b16 %v770, %v768
    %v791 = vpack.c.b16 %v773, %v771
    %v792 = vpack.c.b16 %v774, %v772
    %v793 = vpack.c.b16 %v777, %v775
    %v794 = vpack.c.b16 %v778, %v776
    %811 = vmatprep.subr.bf16.mxu0 %v780
    %812 = vmatpush1.bf16.msra.mxu0 %v779
    %813 = vmatprep.subr.bf16.mxu0 %v782
    %814 = vmatpush1.bf16.msra.mxu0 %v781
    %815 = vmatprep.subr.bf16.mxu0 %v784
    %816 = vmatpush1.bf16.msra.mxu0 %v783
    %817 = vmatprep.subr.bf16.mxu0 %v786
    %818 = vmatpush1.bf16.msra.mxu0 %v785
    %819 = vmatprep.subr.bf16.mxu0 %v788
    %820 = vmatpush1.bf16.msra.mxu0 %v787
    %821 = vmatprep.subr.bf16.mxu0 %v790
    %822 = vmatpush1.bf16.msra.mxu0 %v789
    %823 = vmatprep.subr.bf16.mxu0 %v792
    %824 = vmatpush1.bf16.msra.mxu0 %v791
    %825 = vmatprep.subr.bf16.mxu0 %v794
    %826 = vmatpush1.bf16.msra.mxu0 %v793
    %827 = vmatprep.subr.bf16.mxu0 0
    %828 = vmatpush1.bf16.msra.mxu0 0
    %829 = vmatprep.subr.bf16.mxu0 0
    %830 = vmatpush1.bf16.msra.mxu0 0
    %831 = vmatprep.subr.bf16.mxu0 0
    %832 = vmatpush1.bf16.msra.mxu0 0
    %833 = vmatprep.subr.bf16.mxu0 0
    %834 = vmatpush1.bf16.msra.mxu0 0
    %835 = vmatprep.subr.bf16.mxu0 0
    %836 = vmatpush1.bf16.msra.mxu0 0
    %837 = vmatprep.subr.bf16.mxu0 0
    %838 = vmatpush1.bf16.msra.mxu0 0
    %839 = vmatprep.subr.bf16.mxu0 0
    %840 = vmatpush1.bf16.msra.mxu0 0
    %841 = vmatprep.subr.bf16.mxu0 0
    %842 = vmatpush1.bf16.msra.mxu0 0
    %843 = vmatprep.mubr.bf16.mxu0 0
    %844 = vmatmul.mubr.bf16.gmra.mrb[0].mxu0 %v729
    %v845 = vpop.f32.mrb[0].mxu0
    %v846 = vadd.f32 0.0, %v845
    %v847 = vpop.f32.mrb[0].mxu0
    %v848 = vadd.f32 0.0, %v847
    %v849 = vpop.f32.mrb[0].mxu0
    %v850 = vpop.f32.mrb[0].mxu0
    %851 = vdwg.mxu0
    %v852 = vadd.f32 %v705, %v846
    %v853 = vadd.f32 %v707, %v848
    %s854 = scalar_lea.vmem [#allocation2], 256
    %v855 = vld [vmem:[%s854] sm:$0xff]
    %v856 = vld [vmem:[%s854 + $0x8] sm:$0xff]
    %v857 = vld [vmem:[%s854 + $0x10] sm:$0xff]
    %v858 = vld [vmem:[%s854 + $0x18] sm:$0xff]
    %v859 = vld [vmem:[%s854 + $0x20] sm:$0xff]
    %v860 = vld [vmem:[%s854 + $0x28] sm:$0xff]
    %v861 = vld [vmem:[%s854 + $0x30] sm:$0xff]
    %v862 = vld [vmem:[%s854 + $0x38] sm:$0xff]
    %v863 = vld [vmem:[%s854 + $0x40] sm:$0xff]
    %v864 = vld [vmem:[%s854 + $0x48] sm:$0xff]
    %v865 = vld [vmem:[%s854 + $0x50] sm:$0xff]
    %v866 = vld [vmem:[%s854 + $0x58] sm:$0xff]
    %v867 = vld [vmem:[%s854 + $0x60] sm:$0xff]
    %v868 = vld [vmem:[%s854 + $0x68] sm:$0xff]
    %v869 = vld [vmem:[%s854 + $0x70] sm:$0xff]
    %v870 = vld [vmem:[%s854 + $0x78] sm:$0xff]
    %v871 = vrot.slane %v452, 2
    %v889 = vunpack.c.l.b16 %v855
    %v890 = vunpack.c.h.b16 %v855
    %v891 = vunpack.c.l.b16 %v856
    %v892 = vunpack.c.h.b16 %v856
    %v893 = vunpack.c.l.b16 %v857
    %v894 = vunpack.c.h.b16 %v857
    %v895 = vunpack.c.l.b16 %v858
    %v896 = vunpack.c.h.b16 %v858
    %v897 = vunpack.c.l.b16 %v859
    %v898 = vunpack.c.h.b16 %v859
    %v899 = vunpack.c.l.b16 %v860
    %v900 = vunpack.c.h.b16 %v860
    %v901 = vunpack.c.l.b16 %v861
    %v902 = vunpack.c.h.b16 %v861
    %v903 = vunpack.c.l.b16 %v862
    %v904 = vunpack.c.h.b16 %v862
    %v905 = vunpack.c.l.b16 %v863
    %v906 = vunpack.c.h.b16 %v863
    %v907 = vunpack.c.l.b16 %v864
    %v908 = vunpack.c.h.b16 %v864
    %v909 = vunpack.c.l.b16 %v865
    %v910 = vunpack.c.h.b16 %v865
    %v911 = vunpack.c.l.b16 %v866
    %v912 = vunpack.c.h.b16 %v866
    %v913 = vunpack.c.l.b16 %v867
    %v914 = vunpack.c.h.b16 %v867
    %v915 = vunpack.c.l.b16 %v868
    %v916 = vunpack.c.h.b16 %v868
    %v917 = vunpack.c.l.b16 %v869
    %v918 = vunpack.c.h.b16 %v869
    %v919 = vunpack.c.l.b16 %v870
    %v920 = vunpack.c.h.b16 %v870
    %v921 = vpack.c.b16 %v891, %v889
    %v922 = vpack.c.b16 %v892, %v890
    %v923 = vpack.c.b16 %v895, %v893
    %v924 = vpack.c.b16 %v896, %v894
    %v925 = vpack.c.b16 %v899, %v897
    %v926 = vpack.c.b16 %v900, %v898
    %v927 = vpack.c.b16 %v903, %v901
    %v928 = vpack.c.b16 %v904, %v902
    %v929 = vpack.c.b16 %v907, %v905
    %v930 = vpack.c.b16 %v908, %v906
    %v931 = vpack.c.b16 %v911, %v909
    %v932 = vpack.c.b16 %v912, %v910
    %v933 = vpack.c.b16 %v915, %v913
    %v934 = vpack.c.b16 %v916, %v914
    %v935 = vpack.c.b16 %v919, %v917
    %v936 = vpack.c.b16 %v920, %v918
    %953 = vmatprep.subr.bf16.mxu0 %v922
    %954 = vmatpush1.bf16.msra.mxu0 %v921
    %955 = vmatprep.subr.bf16.mxu0 %v924
    %956 = vmatpush1.bf16.msra.mxu0 %v923
    %957 = vmatprep.subr.bf16.mxu0 %v926
    %958 = vmatpush1.bf16.msra.mxu0 %v925
    %959 = vmatprep.subr.bf16.mxu0 %v928
    %960 = vmatpush1.bf16.msra.mxu0 %v927
    %961 = vmatprep.subr.bf16.mxu0 %v930
    %962 = vmatpush1.bf16.msra.mxu0 %v929
    %963 = vmatprep.subr.bf16.mxu0 %v932
    %964 = vmatpush1.bf16.msra.mxu0 %v931
    %965 = vmatprep.subr.bf16.mxu0 %v934
    %966 = vmatpush1.bf16.msra.mxu0 %v933
    %967 = vmatprep.subr.bf16.mxu0 %v936
    %968 = vmatpush1.bf16.msra.mxu0 %v935
    %969 = vmatprep.subr.bf16.mxu0 0
    %970 = vmatpush1.bf16.msra.mxu0 0
    %971 = vmatprep.subr.bf16.mxu0 0
    %972 = vmatpush1.bf16.msra.mxu0 0
    %973 = vmatprep.subr.bf16.mxu0 0
    %974 = vmatpush1.bf16.msra.mxu0 0
    %975 = vmatprep.subr.bf16.mxu0 0
    %976 = vmatpush1.bf16.msra.mxu0 0
    %977 = vmatprep.subr.bf16.mxu0 0
    %978 = vmatpush1.bf16.msra.mxu0 0
    %979 = vmatprep.subr.bf16.mxu0 0
    %980 = vmatpush1.bf16.msra.mxu0 0
    %981 = vmatprep.subr.bf16.mxu0 0
    %982 = vmatpush1.bf16.msra.mxu0 0
    %983 = vmatprep.subr.bf16.mxu0 0
    %984 = vmatpush1.bf16.msra.mxu0 0
    %985 = vmatprep.mubr.bf16.mxu0 0
    %986 = vmatmul.mubr.bf16.gmra.mrb[0].mxu0 %v871
    %v987 = vpop.f32.mrb[0].mxu0
    %v988 = vadd.f32 0.0, %v987
    %v989 = vpop.f32.mrb[0].mxu0
    %v990 = vadd.f32 0.0, %v989
    %v991 = vpop.f32.mrb[0].mxu0
    %v992 = vpop.f32.mrb[0].mxu0
    %993 = vdwg.mxu0
    %v994 = vadd.f32 %v852, %v988
    %v995 = vadd.f32 %v853, %v990
    %s996 = scalar_lea.vmem [#allocation2], 384
    %v997 = vld [vmem:[%s996] sm:$0xff]
    %v998 = vld [vmem:[%s996 + $0x8] sm:$0xff]
    %v999 = vld [vmem:[%s996 + $0x10] sm:$0xff]
    %v1000 = vld [vmem:[%s996 + $0x18] sm:$0xff]
    %v1001 = vld [vmem:[%s996 + $0x20] sm:$0xff]
    %v1002 = vld [vmem:[%s996 + $0x28] sm:$0xff]
    %v1003 = vld [vmem:[%s996 + $0x30] sm:$0xff]
    %v1004 = vld [vmem:[%s996 + $0x38] sm:$0xff]
    %v1005 = vld [vmem:[%s996 + $0x40] sm:$0xff]
    %v1006 = vld [vmem:[%s996 + $0x48] sm:$0xff]
    %v1007 = vld [vmem:[%s996 + $0x50] sm:$0xff]
    %v1008 = vld [vmem:[%s996 + $0x58] sm:$0xff]
    %v1009 = vld [vmem:[%s996 + $0x60] sm:$0xff]
    %v1010 = vld [vmem:[%s996 + $0x68] sm:$0xff]
    %v1011 = vld [vmem:[%s996 + $0x70] sm:$0xff]
    %v1012 = vld [vmem:[%s996 + $0x78] sm:$0xff]
    %v1013 = vrot.slane %v452, 3
    %v1031 = vunpack.c.l.b16 %v997
    %v1032 = vunpack.c.h.b16 %v997
    %v1033 = vunpack.c.l.b16 %v998
    %v1034 = vunpack.c.h.b16 %v998
    %v1035 = vunpack.c.l.b16 %v999
    %v1036 = vunpack.c.h.b16 %v999
    %v1037 = vunpack.c.l.b16 %v1000
    %v1038 = vunpack.c.h.b16 %v1000
    %v1039 = vunpack.c.l.b16 %v1001
    %v1040 = vunpack.c.h.b16 %v1001
    %v1041 = vunpack.c.l.b16 %v1002
    %v1042 = vunpack.c.h.b16 %v1002
    %v1043 = vunpack.c.l.b16 %v1003
    %v1044 = vunpack.c.h.b16 %v1003
    %v1045 = vunpack.c.l.b16 %v1004
    %v1046 = vunpack.c.h.b16 %v1004
    %v1047 = vunpack.c.l.b16 %v1005
    %v1048 = vunpack.c.h.b16 %v1005
    %v1049 = vunpack.c.l.b16 %v1006
    %v1050 = vunpack.c.h.b16 %v1006
    %v1051 = vunpack.c.l.b16 %v1007
    %v1052 = vunpack.c.h.b16 %v1007
    %v1053 = vunpack.c.l.b16 %v1008
    %v1054 = vunpack.c.h.b16 %v1008
    %v1055 = vunpack.c.l.b16 %v1009
    %v1056 = vunpack.c.h.b16 %v1009
    %v1057 = vunpack.c.l.b16 %v1010
    %v1058 = vunpack.c.h.b16 %v1010
    %v1059 = vunpack.c.l.b16 %v1011
    %v1060 = vunpack.c.h.b16 %v1011
    %v1061 = vunpack.c.l.b16 %v1012
    %v1062 = vunpack.c.h.b16 %v1012
    %v1063 = vpack.c.b16 %v1033, %v1031
    %v1064 = vpack.c.b16 %v1034, %v1032
    %v1065 = vpack.c.b16 %v1037, %v1035
    %v1066 = vpack.c.b16 %v1038, %v1036
    %v1067 = vpack.c.b16 %v1041, %v1039
    %v1068 = vpack.c.b16 %v1042, %v1040
    %v1069 = vpack.c.b16 %v1045, %v1043
    %v1070 = vpack.c.b16 %v1046, %v1044
    %v1071 = vpack.c.b16 %v1049, %v1047
    %v1072 = vpack.c.b16 %v1050, %v1048
    %v1073 = vpack.c.b16 %v1053, %v1051
    %v1074 = vpack.c.b16 %v1054, %v1052
    %v1075 = vpack.c.b16 %v1057, %v1055
    %v1076 = vpack.c.b16 %v1058, %v1056
    %v1077 = vpack.c.b16 %v1061, %v1059
    %v1078 = vpack.c.b16 %v1062, %v1060
    %1095 = vmatprep.subr.bf16.mxu0 %v1064
    %1096 = vmatpush1.bf16.msra.mxu0 %v1063
    %1097 = vmatprep.subr.bf16.mxu0 %v1066
    %1098 = vmatpush1.bf16.msra.mxu0 %v1065
    %1099 = vmatprep.subr.bf16.mxu0 %v1068
    %1100 = vmatpush1.bf16.msra.mxu0 %v1067
    %1101 = vmatprep.subr.bf16.mxu0 %v1070
    %1102 = vmatpush1.bf16.msra.mxu0 %v1069
    %1103 = vmatprep.subr.bf16.mxu0 %v1072
    %1104 = vmatpush1.bf16.msra.mxu0 %v1071
    %1105 = vmatprep.subr.bf16.mxu0 %v1074
    %1106 = vmatpush1.bf16.msra.mxu0 %v1073
    %1107 = vmatprep.subr.bf16.mxu0 %v1076
    %1108 = vmatpush1.bf16.msra.mxu0 %v1075
    %1109 = vmatprep.subr.bf16.mxu0 %v1078
    %1110 = vmatpush1.bf16.msra.mxu0 %v1077
    %1111 = vmatprep.subr.bf16.mxu0 0
    %1112 = vmatpush1.bf16.msra.mxu0 0
    %1113 = vmatprep.subr.bf16.mxu0 0
    %1114 = vmatpush1.bf16.msra.mxu0 0
    %1115 = vmatprep.subr.bf16.mxu0 0
    %1116 = vmatpush1.bf16.msra.mxu0 0
    %1117 = vmatprep.subr.bf16.mxu0 0
    %1118 = vmatpush1.bf16.msra.mxu0 0
    %1119 = vmatprep.subr.bf16.mxu0 0
    %1120 = vmatpush1.bf16.msra.mxu0 0
    %1121 = vmatprep.subr.bf16.mxu0 0
    %1122 = vmatpush1.bf16.msra.mxu0 0
    %1123 = vmatprep.subr.bf16.mxu0 0
    %1124 = vmatpush1.bf16.msra.mxu0 0
    %1125 = vmatprep.subr.bf16.mxu0 0
    %1126 = vmatpush1.bf16.msra.mxu0 0
    %1127 = vmatprep.mubr.bf16.mxu0 0
    %1128 = vmatmul.mubr.bf16.gmra.mrb[0].mxu0 %v1013
    %v1129 = vpop.f32.mrb[0].mxu0
    %v1130 = vadd.f32 0.0, %v1129
    %v1131 = vpop.f32.mrb[0].mxu0
    %v1132 = vadd.f32 0.0, %v1131
    %v1133 = vpop.f32.mrb[0].mxu0
    %v1134 = vpop.f32.mrb[0].mxu0
    %1135 = vdwg.mxu0
    %v1136 = vadd.f32 %v994, %v1130
    %v1137 = vadd.f32 %v995, %v1132
    %v1138 = vpack.c.bf16 %v252, %v252
    %s1139 = scalar_lea.vmem [#allocation2], 512
    %v1140 = vld [vmem:[%s1139] sm:$0xff]
    %v1141 = vld [vmem:[%s1139 + $0x8] sm:$0xff]
    %v1142 = vld [vmem:[%s1139 + $0x10] sm:$0xff]
    %v1143 = vld [vmem:[%s1139 + $0x18] sm:$0xff]
    %v1144 = vld [vmem:[%s1139 + $0x20] sm:$0xff]
    %v1145 = vld [vmem:[%s1139 + $0x28] sm:$0xff]
    %v1146 = vld [vmem:[%s1139 + $0x30] sm:$0xff]
    %v1147 = vld [vmem:[%s1139 + $0x38] sm:$0xff]
    %v1148 = vld [vmem:[%s1139 + $0x40] sm:$0xff]
    %v1149 = vld [vmem:[%s1139 + $0x48] sm:$0xff]
    %v1150 = vld [vmem:[%s1139 + $0x50] sm:$0xff]
    %v1151 = vld [vmem:[%s1139 + $0x58] sm:$0xff]
    %v1152 = vld [vmem:[%s1139 + $0x60] sm:$0xff]
    %v1153 = vld [vmem:[%s1139 + $0x68] sm:$0xff]
    %v1154 = vld [vmem:[%s1139 + $0x70] sm:$0xff]
    %v1155 = vld [vmem:[%s1139 + $0x78] sm:$0xff]
    %v1172 = vunpack.c.l.b16 %v1140
    %v1173 = vunpack.c.h.b16 %v1140
    %v1174 = vunpack.c.l.b16 %v1141
    %v1175 = vunpack.c.h.b16 %v1141
    %v1176 = vunpack.c.l.b16 %v1142
    %v1177 = vunpack.c.h.b16 %v1142
    %v1178 = vunpack.c.l.b16 %v1143
    %v1179 = vunpack.c.h.b16 %v1143
    %v1180 = vunpack.c.l.b16 %v1144
    %v1181 = vunpack.c.h.b16 %v1144
    %v1182 = vunpack.c.l.b16 %v1145
    %v1183 = vunpack.c.h.b16 %v1145
    %v1184 = vunpack.c.l.b16 %v1146
    %v1185 = vunpack.c.h.b16 %v1146
    %v1186 = vunpack.c.l.b16 %v1147
    %v1187 = vunpack.c.h.b16 %v1147
    %v1188 = vunpack.c.l.b16 %v1148
    %v1189 = vunpack.c.h.b16 %v1148
    %v1190 = vunpack.c.l.b16 %v1149
    %v1191 = vunpack.c.h.b16 %v1149
    %v1192 = vunpack.c.l.b16 %v1150
    %v1193 = vunpack.c.h.b16 %v1150
    %v1194 = vunpack.c.l.b16 %v1151
    %v1195 = vunpack.c.h.b16 %v1151
    %v1196 = vunpack.c.l.b16 %v1152
    %v1197 = vunpack.c.h.b16 %v1152
    %v1198 = vunpack.c.l.b16 %v1153
    %v1199 = vunpack.c.h.b16 %v1153
    %v1200 = vunpack.c.l.b16 %v1154
    %v1201 = vunpack.c.h.b16 %v1154
    %v1202 = vunpack.c.l.b16 %v1155
    %v1203 = vunpack.c.h.b16 %v1155
    %v1204 = vpack.c.b16 %v1174, %v1172
    %v1205 = vpack.c.b16 %v1175, %v1173
    %v1206 = vpack.c.b16 %v1178, %v1176
    %v1207 = vpack.c.b16 %v1179, %v1177
    %v1208 = vpack.c.b16 %v1182, %v1180
    %v1209 = vpack.c.b16 %v1183, %v1181
    %v1210 = vpack.c.b16 %v1186, %v1184
    %v1211 = vpack.c.b16 %v1187, %v1185
    %v1212 = vpack.c.b16 %v1190, %v1188
    %v1213 = vpack.c.b16 %v1191, %v1189
    %v1214 = vpack.c.b16 %v1194, %v1192
    %v1215 = vpack.c.b16 %v1195, %v1193
    %v1216 = vpack.c.b16 %v1198, %v1196
    %v1217 = vpack.c.b16 %v1199, %v1197
    %v1218 = vpack.c.b16 %v1202, %v1200
    %v1219 = vpack.c.b16 %v1203, %v1201
    %1236 = vmatprep.subr.bf16.mxu0 %v1205
    %1237 = vmatpush1.bf16.msra.mxu0 %v1204
    %1238 = vmatprep.subr.bf16.mxu0 %v1207
    %1239 = vmatpush1.bf16.msra.mxu0 %v1206
    %1240 = vmatprep.subr.bf16.mxu0 %v1209
    %1241 = vmatpush1.bf16.msra.mxu0 %v1208
    %1242 = vmatprep.subr.bf16.mxu0 %v1211
    %1243 = vmatpush1.bf16.msra.mxu0 %v1210
    %1244 = vmatprep.subr.bf16.mxu0 %v1213
    %1245 = vmatpush1.bf16.msra.mxu0 %v1212
    %1246 = vmatprep.subr.bf16.mxu0 %v1215
    %1247 = vmatpush1.bf16.msra.mxu0 %v1214
    %1248 = vmatprep.subr.bf16.mxu0 %v1217
    %1249 = vmatpush1.bf16.msra.mxu0 %v1216
    %1250 = vmatprep.subr.bf16.mxu0 %v1219
    %1251 = vmatpush1.bf16.msra.mxu0 %v1218
    %1252 = vmatprep.subr.bf16.mxu0 0
    %1253 = vmatpush1.bf16.msra.mxu0 0
    %1254 = vmatprep.subr.bf16.mxu0 0
    %1255 = vmatpush1.bf16.msra.mxu0 0
    %1256 = vmatprep.subr.bf16.mxu0 0
    %1257 = vmatpush1.bf16.msra.mxu0 0
    %1258 = vmatprep.subr.bf16.mxu0 0
    %1259 = vmatpush1.bf16.msra.mxu0 0
    %1260 = vmatprep.subr.bf16.mxu0 0
    %1261 = vmatpush1.bf16.msra.mxu0 0
    %1262 = vmatprep.subr.bf16.mxu0 0
    %1263 = vmatpush1.bf16.msra.mxu0 0
    %1264 = vmatprep.subr.bf16.mxu0 0
    %1265 = vmatpush1.bf16.msra.mxu0 0
    %1266 = vmatprep.subr.bf16.mxu0 0
    %1267 = vmatpush1.bf16.msra.mxu0 0
    %1268 = vmatprep.mubr.bf16.mxu0 0
    %1269 = vmatmul.mubr.bf16.gmra.mrb[0].mxu0 %v1138
    %v1270 = vpop.f32.mrb[0].mxu0
    %v1271 = vadd.f32 0.0, %v1270
    %v1272 = vpop.f32.mrb[0].mxu0
    %v1273 = vadd.f32 0.0, %v1272
    %v1274 = vpop.f32.mrb[0].mxu0
    %v1275 = vpop.f32.mrb[0].mxu0
    %1276 = vdwg.mxu0
    %v1277 = vadd.f32 %v1136, %v1271
    %v1278 = vadd.f32 %v1137, %v1273
    %s1279 = scalar_lea.vmem [#allocation2], 640
    %v1280 = vld [vmem:[%s1279] sm:$0xff]
    %v1281 = vld [vmem:[%s1279 + $0x8] sm:$0xff]
    %v1282 = vld [vmem:[%s1279 + $0x10] sm:$0xff]
    %v1283 = vld [vmem:[%s1279 + $0x18] sm:$0xff]
    %v1284 = vld [vmem:[%s1279 + $0x20] sm:$0xff]
    %v1285 = vld [vmem:[%s1279 + $0x28] sm:$0xff]
    %v1286 = vld [vmem:[%s1279 + $0x30] sm:$0xff]
    %v1287 = vld [vmem:[%s1279 + $0x38] sm:$0xff]
    %v1288 = vld [vmem:[%s1279 + $0x40] sm:$0xff]
    %v1289 = vld [vmem:[%s1279 + $0x48] sm:$0xff]
    %v1290 = vld [vmem:[%s1279 + $0x50] sm:$0xff]
    %v1291 = vld [vmem:[%s1279 + $0x58] sm:$0xff]
    %v1292 = vld [vmem:[%s1279 + $0x60] sm:$0xff]
    %v1293 = vld [vmem:[%s1279 + $0x68] sm:$0xff]
    %v1294 = vld [vmem:[%s1279 + $0x70] sm:$0xff]
    %v1295 = vld [vmem:[%s1279 + $0x78] sm:$0xff]
    %v1297 = vrot.slane %v1138, 1
    %v1315 = vunpack.c.l.b16 %v1280
    %v1316 = vunpack.c.h.b16 %v1280
    %v1317 = vunpack.c.l.b16 %v1281
    %v1318 = vunpack.c.h.b16 %v1281
    %v1319 = vunpack.c.l.b16 %v1282
    %v1320 = vunpack.c.h.b16 %v1282
    %v1321 = vunpack.c.l.b16 %v1283
    %v1322 = vunpack.c.h.b16 %v1283
    %v1323 = vunpack.c.l.b16 %v1284
    %v1324 = vunpack.c.h.b16 %v1284
    %v1325 = vunpack.c.l.b16 %v1285
    %v1326 = vunpack.c.h.b16 %v1285
    %v1327 = vunpack.c.l.b16 %v1286
    %v1328 = vunpack.c.h.b16 %v1286
    %v1329 = vunpack.c.l.b16 %v1287
    %v1330 = vunpack.c.h.b16 %v1287
    %v1331 = vunpack.c.l.b16 %v1288
    %v1332 = vunpack.c.h.b16 %v1288
    %v1333 = vunpack.c.l.b16 %v1289
    %v1334 = vunpack.c.h.b16 %v1289
    %v1335 = vunpack.c.l.b16 %v1290
    %v1336 = vunpack.c.h.b16 %v1290
    %v1337 = vunpack.c.l.b16 %v1291
    %v1338 = vunpack.c.h.b16 %v1291
    %v1339 = vunpack.c.l.b16 %v1292
    %v1340 = vunpack.c.h.b16 %v1292
    %v1341 = vunpack.c.l.b16 %v1293
    %v1342 = vunpack.c.h.b16 %v1293
    %v1343 = vunpack.c.l.b16 %v1294
    %v1344 = vunpack.c.h.b16 %v1294
    %v1345 = vunpack.c.l.b16 %v1295
    %v1346 = vunpack.c.h.b16 %v1295
    %v1347 = vpack.c.b16 %v1317, %v1315
    %v1348 = vpack.c.b16 %v1318, %v1316
    %v1349 = vpack.c.b16 %v1321, %v1319
    %v1350 = vpack.c.b16 %v1322, %v1320
    %v1351 = vpack.c.b16 %v1325, %v1323
    %v1352 = vpack.c.b16 %v1326, %v1324
    %v1353 = vpack.c.b16 %v1329, %v1327
    %v1354 = vpack.c.b16 %v1330, %v1328
    %v1355 = vpack.c.b16 %v1333, %v1331
    %v1356 = vpack.c.b16 %v1334, %v1332
    %v1357 = vpack.c.b16 %v1337, %v1335
    %v1358 = vpack.c.b16 %v1338, %v1336
    %v1359 = vpack.c.b16 %v1341, %v1339
    %v1360 = vpack.c.b16 %v1342, %v1340
    %v1361 = vpack.c.b16 %v1345, %v1343
    %v1362 = vpack.c.b16 %v1346, %v1344
    %1379 = vmatprep.subr.bf16.mxu0 %v1348
    %1380 = vmatpush1.bf16.msra.mxu0 %v1347
    %1381 = vmatprep.subr.bf16.mxu0 %v1350
    %1382 = vmatpush1.bf16.msra.mxu0 %v1349
    %1383 = vmatprep.subr.bf16.mxu0 %v1352
    %1384 = vmatpush1.bf16.msra.mxu0 %v1351
    %1385 = vmatprep.subr.bf16.mxu0 %v1354
    %1386 = vmatpush1.bf16.msra.mxu0 %v1353
    %1387 = vmatprep.subr.bf16.mxu0 %v1356
    %1388 = vmatpush1.bf16.msra.mxu0 %v1355
    %1389 = vmatprep.subr.bf16.mxu0 %v1358
    %1390 = vmatpush1.bf16.msra.mxu0 %v1357
    %1391 = vmatprep.subr.bf16.mxu0 %v1360
    %1392 = vmatpush1.bf16.msra.mxu0 %v1359
    %1393 = vmatprep.subr.bf16.mxu0 %v1362
    %1394 = vmatpush1.bf16.msra.mxu0 %v1361
    %1395 = vmatprep.subr.bf16.mxu0 0
    %1396 = vmatpush1.bf16.msra.mxu0 0
    %1397 = vmatprep.subr.bf16.mxu0 0
    %1398 = vmatpush1.bf16.msra.mxu0 0
    %1399 = vmatprep.subr.bf16.mxu0 0
    %1400 = vmatpush1.bf16.msra.mxu0 0
    %1401 = vmatprep.subr.bf16.mxu0 0
    %1402 = vmatpush1.bf16.msra.mxu0 0
    %1403 = vmatprep.subr.bf16.mxu0 0
    %1404 = vmatpush1.bf16.msra.mxu0 0
    %1405 = vmatprep.subr.bf16.mxu0 0
    %1406 = vmatpush1.bf16.msra.mxu0 0
    %1407 = vmatprep.subr.bf16.mxu0 0
    %1408 = vmatpush1.bf16.msra.mxu0 0
    %1409 = vmatprep.subr.bf16.mxu0 0
    %1410 = vmatpush1.bf16.msra.mxu0 0
    %1411 = vmatprep.mubr.bf16.mxu0 0
    %1412 = vmatmul.mubr.bf16.gmra.mrb[0].mxu0 %v1297
    %v1413 = vpop.f32.mrb[0].mxu0
    %v1414 = vadd.f32 0.0, %v1413
    %v1415 = vpop.f32.mrb[0].mxu0
    %v1416 = vadd.f32 0.0, %v1415
    %v1417 = vpop.f32.mrb[0].mxu0
    %v1418 = vpop.f32.mrb[0].mxu0
    %1419 = vdwg.mxu0
    %v1420 = vadd.f32 %v1277, %v1414
    %v1421 = vadd.f32 %v1278, %v1416
    %s1422 = scalar_lea.vmem [#allocation2], 768
    %v1423 = vld [vmem:[%s1422] sm:$0xff]
    %v1424 = vld [vmem:[%s1422 + $0x8] sm:$0xff]
    %v1425 = vld [vmem:[%s1422 + $0x10] sm:$0xff]
    %v1426 = vld [vmem:[%s1422 + $0x18] sm:$0xff]
    %v1427 = vld [vmem:[%s1422 + $0x20] sm:$0xff]
    %v1428 = vld [vmem:[%s1422 + $0x28] sm:$0xff]
    %v1429 = vld [vmem:[%s1422 + $0x30] sm:$0xff]
    %v1430 = vld [vmem:[%s1422 + $0x38] sm:$0xff]
    %v1431 = vld [vmem:[%s1422 + $0x40] sm:$0xff]
    %v1432 = vld [vmem:[%s1422 + $0x48] sm:$0xff]
    %v1433 = vld [vmem:[%s1422 + $0x50] sm:$0xff]
    %v1434 = vld [vmem:[%s1422 + $0x58] sm:$0xff]
    %v1435 = vld [vmem:[%s1422 + $0x60] sm:$0xff]
    %v1436 = vld [vmem:[%s1422 + $0x68] sm:$0xff]
    %v1437 = vld [vmem:[%s1422 + $0x70] sm:$0xff]
    %v1438 = vld [vmem:[%s1422 + $0x78] sm:$0xff]
    %v1439 = vrot.slane %v1138, 2
    %v1457 = vunpack.c.l.b16 %v1423
    %v1458 = vunpack.c.h.b16 %v1423
    %v1459 = vunpack.c.l.b16 %v1424
    %v1460 = vunpack.c.h.b16 %v1424
    %v1461 = vunpack.c.l.b16 %v1425
    %v1462 = vunpack.c.h.b16 %v1425
    %v1463 = vunpack.c.l.b16 %v1426
    %v1464 = vunpack.c.h.b16 %v1426
    %v1465 = vunpack.c.l.b16 %v1427
    %v1466 = vunpack.c.h.b16 %v1427
    %v1467 = vunpack.c.l.b16 %v1428
    %v1468 = vunpack.c.h.b16 %v1428
    %v1469 = vunpack.c.l.b16 %v1429
    %v1470 = vunpack.c.h.b16 %v1429
    %v1471 = vunpack.c.l.b16 %v1430
    %v1472 = vunpack.c.h.b16 %v1430
    %v1473 = vunpack.c.l.b16 %v1431
    %v1474 = vunpack.c.h.b16 %v1431
    %v1475 = vunpack.c.l.b16 %v1432
    %v1476 = vunpack.c.h.b16 %v1432
    %v1477 = vunpack.c.l.b16 %v1433
    %v1478 = vunpack.c.h.b16 %v1433
    %v1479 = vunpack.c.l.b16 %v1434
    %v1480 = vunpack.c.h.b16 %v1434
    %v1481 = vunpack.c.l.b16 %v1435
    %v1482 = vunpack.c.h.b16 %v1435
    %v1483 = vunpack.c.l.b16 %v1436
    %v1484 = vunpack.c.h.b16 %v1436
    %v1485 = vunpack.c.l.b16 %v1437
    %v1486 = vunpack.c.h.b16 %v1437
    %v1487 = vunpack.c.l.b16 %v1438
    %v1488 = vunpack.c.h.b16 %v1438
    %v1489 = vpack.c.b16 %v1459, %v1457
    %v1490 = vpack.c.b16 %v1460, %v1458
    %v1491 = vpack.c.b16 %v1463, %v1461
    %v1492 = vpack.c.b16 %v1464, %v1462
    %v1493 = vpack.c.b16 %v1467, %v1465
    %v1494 = vpack.c.b16 %v1468, %v1466
    %v1495 = vpack.c.b16 %v1471, %v1469
    %v1496 = vpack.c.b16 %v1472, %v1470
    %v1497 = vpack.c.b16 %v1475, %v1473
    %v1498 = vpack.c.b16 %v1476, %v1474
    %v1499 = vpack.c.b16 %v1479, %v1477
    %v1500 = vpack.c.b16 %v1480, %v1478
    %v1501 = vpack.c.b16 %v1483, %v1481
    %v1502 = vpack.c.b16 %v1484, %v1482
    %v1503 = vpack.c.b16 %v1487, %v1485
    %v1504 = vpack.c.b16 %v1488, %v1486
    %1521 = vmatprep.subr.bf16.mxu0 %v1490
    %1522 = vmatpush1.bf16.msra.mxu0 %v1489
    %1523 = vmatprep.subr.bf16.mxu0 %v1492
    %1524 = vmatpush1.bf16.msra.mxu0 %v1491
    %1525 = vmatprep.subr.bf16.mxu0 %v1494
    %1526 = vmatpush1.bf16.msra.mxu0 %v1493
    %1527 = vmatprep.subr.bf16.mxu0 %v1496
    %1528 = vmatpush1.bf16.msra.mxu0 %v1495
    %1529 = vmatprep.subr.bf16.mxu0 %v1498
    %1530 = vmatpush1.bf16.msra.mxu0 %v1497
    %1531 = vmatprep.subr.bf16.mxu0 %v1500
    %1532 = vmatpush1.bf16.msra.mxu0 %v1499
    %1533 = vmatprep.subr.bf16.mxu0 %v1502
    %1534 = vmatpush1.bf16.msra.mxu0 %v1501
    %1535 = vmatprep.subr.bf16.mxu0 %v1504
    %1536 = vmatpush1.bf16.msra.mxu0 %v1503
    %1537 = vmatprep.subr.bf16.mxu0 0
    %1538 = vmatpush1.bf16.msra.mxu0 0
    %1539 = vmatprep.subr.bf16.mxu0 0
    %1540 = vmatpush1.bf16.msra.mxu0 0
    %1541 = vmatprep.subr.bf16.mxu0 0
    %1542 = vmatpush1.bf16.msra.mxu0 0
    %1543 = vmatprep.subr.bf16.mxu0 0
    %1544 = vmatpush1.bf16.msra.mxu0 0
    %1545 = vmatprep.subr.bf16.mxu0 0
    %1546 = vmatpush1.bf16.msra.mxu0 0
    %1547 = vmatprep.subr.bf16.mxu0 0
    %1548 = vmatpush1.bf16.msra.mxu0 0
    %1549 = vmatprep.subr.bf16.mxu0 0
    %1550 = vmatpush1.bf16.msra.mxu0 0
    %1551 = vmatprep.subr.bf16.mxu0 0
    %1552 = vmatpush1.bf16.msra.mxu0 0
    %1553 = vmatprep.mubr.bf16.mxu0 0
    %1554 = vmatmul.mubr.bf16.gmra.mrb[0].mxu0 %v1439
    %v1555 = vpop.f32.mrb[0].mxu0
    %v1556 = vadd.f32 0.0, %v1555
    %v1557 = vpop.f32.mrb[0].mxu0
    %v1558 = vadd.f32 0.0, %v1557
    %v1559 = vpop.f32.mrb[0].mxu0
    %v1560 = vpop.f32.mrb[0].mxu0
    %1561 = vdwg.mxu0
    %v1562 = vadd.f32 %v1420, %v1556
    %v1563 = vadd.f32 %v1421, %v1558
    %s1564 = scalar_lea.vmem [#allocation2], 896
    %v1565 = vld [vmem:[%s1564] sm:$0xff]
    %v1566 = vld [vmem:[%s1564 + $0x8] sm:$0xff]
    %v1567 = vld [vmem:[%s1564 + $0x10] sm:$0xff]
    %v1568 = vld [vmem:[%s1564 + $0x18] sm:$0xff]
    %v1569 = vld [vmem:[%s1564 + $0x20] sm:$0xff]
    %v1570 = vld [vmem:[%s1564 + $0x28] sm:$0xff]
    %v1571 = vld [vmem:[%s1564 + $0x30] sm:$0xff]
    %v1572 = vld [vmem:[%s1564 + $0x38] sm:$0xff]
    %v1573 = vld [vmem:[%s1564 + $0x40] sm:$0xff]
    %v1574 = vld [vmem:[%s1564 + $0x48] sm:$0xff]
    %v1575 = vld [vmem:[%s1564 + $0x50] sm:$0xff]
    %v1576 = vld [vmem:[%s1564 + $0x58] sm:$0xff]
    %v1577 = vld [vmem:[%s1564 + $0x60] sm:$0xff]
    %v1578 = vld [vmem:[%s1564 + $0x68] sm:$0xff]
    %v1579 = vld [vmem:[%s1564 + $0x70] sm:$0xff]
    %v1580 = vld [vmem:[%s1564 + $0x78] sm:$0xff]
    %v1581 = vrot.slane %v1138, 3
    %v1599 = vunpack.c.l.b16 %v1565
    %v1600 = vunpack.c.h.b16 %v1565
    %v1601 = vunpack.c.l.b16 %v1566
    %v1602 = vunpack.c.h.b16 %v1566
    %v1603 = vunpack.c.l.b16 %v1567
    %v1604 = vunpack.c.h.b16 %v1567
    %v1605 = vunpack.c.l.b16 %v1568
    %v1606 = vunpack.c.h.b16 %v1568
    %v1607 = vunpack.c.l.b16 %v1569
    %v1608 = vunpack.c.h.b16 %v1569
    %v1609 = vunpack.c.l.b16 %v1570
    %v1610 = vunpack.c.h.b16 %v1570
    %v1611 = vunpack.c.l.b16 %v1571
    %v1612 = vunpack.c.h.b16 %v1571
    %v1613 = vunpack.c.l.b16 %v1572
    %v1614 = vunpack.c.h.b16 %v1572
    %v1615 = vunpack.c.l.b16 %v1573
    %v1616 = vunpack.c.h.b16 %v1573
    %v1617 = vunpack.c.l.b16 %v1574
    %v1618 = vunpack.c.h.b16 %v1574
    %v1619 = vunpack.c.l.b16 %v1575
    %v1620 = vunpack.c.h.b16 %v1575
    %v1621 = vunpack.c.l.b16 %v1576
    %v1622 = vunpack.c.h.b16 %v1576
    %v1623 = vunpack.c.l.b16 %v1577
    %v1624 = vunpack.c.h.b16 %v1577
    %v1625 = vunpack.c.l.b16 %v1578
    %v1626 = vunpack.c.h.b16 %v1578
    %v1627 = vunpack.c.l.b16 %v1579
    %v1628 = vunpack.c.h.b16 %v1579
    %v1629 = vunpack.c.l.b16 %v1580
    %v1630 = vunpack.c.h.b16 %v1580
    %v1631 = vpack.c.b16 %v1601, %v1599
    %v1632 = vpack.c.b16 %v1602, %v1600
    %v1633 = vpack.c.b16 %v1605, %v1603
    %v1634 = vpack.c.b16 %v1606, %v1604
    %v1635 = vpack.c.b16 %v1609, %v1607
    %v1636 = vpack.c.b16 %v1610, %v1608
    %v1637 = vpack.c.b16 %v1613, %v1611
    %v1638 = vpack.c.b16 %v1614, %v1612
    %v1639 = vpack.c.b16 %v1617, %v1615
    %v1640 = vpack.c.b16 %v1618, %v1616
    %v1641 = vpack.c.b16 %v1621, %v1619
    %v1642 = vpack.c.b16 %v1622, %v1620
    %v1643 = vpack.c.b16 %v1625, %v1623
    %v1644 = vpack.c.b16 %v1626, %v1624
    %v1645 = vpack.c.b16 %v1629, %v1627
    %v1646 = vpack.c.b16 %v1630, %v1628
    %1663 = vmatprep.subr.bf16.mxu0 %v1632
    %1664 = vmatpush1.bf16.msra.mxu0 %v1631
    %1665 = vmatprep.subr.bf16.mxu0 %v1634
    %1666 = vmatpush1.bf16.msra.mxu0 %v1633
    %1667 = vmatprep.subr.bf16.mxu0 %v1636
    %1668 = vmatpush1.bf16.msra.mxu0 %v1635
    %1669 = vmatprep.subr.bf16.mxu0 %v1638
    %1670 = vmatpush1.bf16.msra.mxu0 %v1637
    %1671 = vmatprep.subr.bf16.mxu0 %v1640
    %1672 = vmatpush1.bf16.msra.mxu0 %v1639
    %1673 = vmatprep.subr.bf16.mxu0 %v1642
    %1674 = vmatpush1.bf16.msra.mxu0 %v1641
    %1675 = vmatprep.subr.bf16.mxu0 %v1644
    %1676 = vmatpush1.bf16.msra.mxu0 %v1643
    %1677 = vmatprep.subr.bf16.mxu0 %v1646
    %1678 = vmatpush1.bf16.msra.mxu0 %v1645
    %1679 = vmatprep.subr.bf16.mxu0 0
    %1680 = vmatpush1.bf16.msra.mxu0 0
    %1681 = vmatprep.subr.bf16.mxu0 0
    %1682 = vmatpush1.bf16.msra.mxu0 0
    %1683 = vmatprep.subr.bf16.mxu0 0
    %1684 = vmatpush1.bf16.msra.mxu0 0
    %1685 = vmatprep.subr.bf16.mxu0 0
    %1686 = vmatpush1.bf16.msra.mxu0 0
    %1687 = vmatprep.subr.bf16.mxu0 0
    %1688 = vmatpush1.bf16.msra.mxu0 0
    %1689 = vmatprep.subr.bf16.mxu0 0
    %1690 = vmatpush1.bf16.msra.mxu0 0
    %1691 = vmatprep.subr.bf16.mxu0 0
    %1692 = vmatpush1.bf16.msra.mxu0 0
    %1693 = vmatprep.subr.bf16.mxu0 0
    %1694 = vmatpush1.bf16.msra.mxu0 0
    %1695 = vmatprep.mubr.bf16.mxu0 0
    %1696 = vmatmul.mubr.bf16.gmra.mrb[0].mxu0 %v1581
    %v1697 = vpop.f32.mrb[0].mxu0
    %v1698 = vadd.f32 0.0, %v1697
    %v1699 = vpop.f32.mrb[0].mxu0
    %v1700 = vadd.f32 0.0, %v1699
    %v1701 = vpop.f32.mrb[0].mxu0
    %v1702 = vpop.f32.mrb[0].mxu0
    %1703 = vdwg.mxu0
    %v1704 = vadd.f32 %v1562, %v1698
    %v1705 = vadd.f32 %v1563, %v1700
    %v1706 = vpack.c.bf16 %v253, %v253
    %s1707 = scalar_lea.vmem [#allocation2], 1024
    %v1708 = vld [vmem:[%s1707] sm:$0xff]
    %v1709 = vld [vmem:[%s1707 + $0x8] sm:$0xff]
    %v1710 = vld [vmem:[%s1707 + $0x10] sm:$0xff]
    %v1711 = vld [vmem:[%s1707 + $0x18] sm:$0xff]
    %v1712 = vld [vmem:[%s1707 + $0x20] sm:$0xff]
    %v1713 = vld [vmem:[%s1707 + $0x28] sm:$0xff]
    %v1714 = vld [vmem:[%s1707 + $0x30] sm:$0xff]
    %v1715 = vld [vmem:[%s1707 + $0x38] sm:$0xff]
    %v1716 = vld [vmem:[%s1707 + $0x40] sm:$0xff]
    %v1717 = vld [vmem:[%s1707 + $0x48] sm:$0xff]
    %v1718 = vld [vmem:[%s1707 + $0x50] sm:$0xff]
    %v1719 = vld [vmem:[%s1707 + $0x58] sm:$0xff]
    %v1720 = vld [vmem:[%s1707 + $0x60] sm:$0xff]
    %v1721 = vld [vmem:[%s1707 + $0x68] sm:$0xff]
    %v1722 = vld [vmem:[%s1707 + $0x70] sm:$0xff]
    %v1723 = vld [vmem:[%s1707 + $0x78] sm:$0xff]
    %v1740 = vunpack.c.l.b16 %v1708
    %v1741 = vunpack.c.h.b16 %v1708
    %v1742 = vunpack.c.l.b16 %v1709
    %v1743 = vunpack.c.h.b16 %v1709
    %v1744 = vunpack.c.l.b16 %v1710
    %v1745 = vunpack.c.h.b16 %v1710
    %v1746 = vunpack.c.l.b16 %v1711
    %v1747 = vunpack.c.h.b16 %v1711
    %v1748 = vunpack.c.l.b16 %v1712
    %v1749 = vunpack.c.h.b16 %v1712
    %v1750 = vunpack.c.l.b16 %v1713
    %v1751 = vunpack.c.h.b16 %v1713
    %v1752 = vunpack.c.l.b16 %v1714
    %v1753 = vunpack.c.h.b16 %v1714
    %v1754 = vunpack.c.l.b16 %v1715
    %v1755 = vunpack.c.h.b16 %v1715
    %v1756 = vunpack.c.l.b16 %v1716
    %v1757 = vunpack.c.h.b16 %v1716
    %v1758 = vunpack.c.l.b16 %v1717
    %v1759 = vunpack.c.h.b16 %v1717
    %v1760 = vunpack.c.l.b16 %v1718
    %v1761 = vunpack.c.h.b16 %v1718
    %v1762 = vunpack.c.l.b16 %v1719
    %v1763 = vunpack.c.h.b16 %v1719
    %v1764 = vunpack.c.l.b16 %v1720
    %v1765 = vunpack.c.h.b16 %v1720
    %v1766 = vunpack.c.l.b16 %v1721
    %v1767 = vunpack.c.h.b16 %v1721
    %v1768 = vunpack.c.l.b16 %v1722
    %v1769 = vunpack.c.h.b16 %v1722
    %v1770 = vunpack.c.l.b16 %v1723
    %v1771 = vunpack.c.h.b16 %v1723
    %v1772 = vpack.c.b16 %v1742, %v1740
    %v1773 = vpack.c.b16 %v1743, %v1741
    %v1774 = vpack.c.b16 %v1746, %v1744
    %v1775 = vpack.c.b16 %v1747, %v1745
    %v1776 = vpack.c.b16 %v1750, %v1748
    %v1777 = vpack.c.b16 %v1751, %v1749
    %v1778 = vpack.c.b16 %v1754, %v1752
    %v1779 = vpack.c.b16 %v1755, %v1753
    %v1780 = vpack.c.b16 %v1758, %v1756
    %v1781 = vpack.c.b16 %v1759, %v1757
    %v1782 = vpack.c.b16 %v1762, %v1760
    %v1783 = vpack.c.b16 %v1763, %v1761
    %v1784 = vpack.c.b16 %v1766, %v1764
    %v1785 = vpack.c.b16 %v1767, %v1765
    %v1786 = vpack.c.b16 %v1770, %v1768
    %v1787 = vpack.c.b16 %v1771, %v1769
    %1804 = vmatprep.subr.bf16.mxu0 %v1773
    %1805 = vmatpush1.bf16.msra.mxu0 %v1772
    %1806 = vmatprep.subr.bf16.mxu0 %v1775
    %1807 = vmatpush1.bf16.msra.mxu0 %v1774
    %1808 = vmatprep.subr.bf16.mxu0 %v1777
    %1809 = vmatpush1.bf16.msra.mxu0 %v1776
    %1810 = vmatprep.subr.bf16.mxu0 %v1779
    %1811 = vmatpush1.bf16.msra.mxu0 %v1778
    %1812 = vmatprep.subr.bf16.mxu0 %v1781
    %1813 = vmatpush1.bf16.msra.mxu0 %v1780
    %1814 = vmatprep.subr.bf16.mxu0 %v1783
    %1815 = vmatpush1.bf16.msra.mxu0 %v1782
    %1816 = vmatprep.subr.bf16.mxu0 %v1785
    %1817 = vmatpush1.bf16.msra.mxu0 %v1784
    %1818 = vmatprep.subr.bf16.mxu0 %v1787
    %1819 = vmatpush1.bf16.msra.mxu0 %v1786
    %1820 = vmatprep.subr.bf16.mxu0 0
    %1821 = vmatpush1.bf16.msra.mxu0 0
    %1822 = vmatprep.subr.bf16.mxu0 0
    %1823 = vmatpush1.bf16.msra.mxu0 0
    %1824 = vmatprep.subr.bf16.mxu0 0
    %1825 = vmatpush1.bf16.msra.mxu0 0
    %1826 = vmatprep.subr.bf16.mxu0 0
    %1827 = vmatpush1.bf16.msra.mxu0 0
    %1828 = vmatprep.subr.bf16.mxu0 0
    %1829 = vmatpush1.bf16.msra.mxu0 0
    %1830 = vmatprep.subr.bf16.mxu0 0
    %1831 = vmatpush1.bf16.msra.mxu0 0
    %1832 = vmatprep.subr.bf16.mxu0 0
    %1833 = vmatpush1.bf16.msra.mxu0 0
    %1834 = vmatprep.subr.bf16.mxu0 0
    %1835 = vmatpush1.bf16.msra.mxu0 0
    %1836 = vmatprep.mubr.bf16.mxu0 0
    %1837 = vmatmul.mubr.bf16.gmra.mrb[0].mxu0 %v1706
    %v1838 = vpop.f32.mrb[0].mxu0
    %v1839 = vadd.f32 0.0, %v1838
    %v1840 = vpop.f32.mrb[0].mxu0
    %v1841 = vadd.f32 0.0, %v1840
    %v1842 = vpop.f32.mrb[0].mxu0
    %v1843 = vpop.f32.mrb[0].mxu0
    %1844 = vdwg.mxu0
    %v1845 = vadd.f32 %v1704, %v1839
    %v1846 = vadd.f32 %v1705, %v1841
    %v1847 = vld [vmem:[%s6] sm:$0x3]
    %v1849 = vlaneseq
    %v1850 = vshrl.u32 %v1849, 7
    %v1851 = vsub.s32 0, %v1850
    %v1852 = vrot.slane %v1847, %v1851
    %v1853 = vlaneseq
    %v1854 = vshrl.u32 %v1853, 7
    %v1855 = vsub.s32 1, %v1854
    %v1856 = vrot.slane %v1847, %v1855
    %v1859 = vadd.f32 %v1845, %v1852
    %v1860 = vadd.f32 %v1846, %v1856
    %v1861 = vmax.f32 %v1859, 0.0
    %v1862 = vmax.f32 %v1860, 0.0
    %v1863 = vpack.c.bf16 %v1861, %v1861
    %v1864 = vpack.c.bf16 %v1862, %v1862
    %v1865 = vld [vmem:[%s7] sm:$0xf]
    %v1866 = vld [vmem:[%s7 + $0x4] sm:$0xf]
    %v1867 = vld [vmem:[%s7 + $0x8] sm:$0xf]
    %v1868 = vld [vmem:[%s7 + $0xc] sm:$0xf]
    %v1869 = vld [vmem:[%s7 + $0x10] sm:$0xf]
    %v1870 = vld [vmem:[%s7 + $0x14] sm:$0xf]
    %v1871 = vld [vmem:[%s7 + $0x18] sm:$0xf]
    %v1872 = vld [vmem:[%s7 + $0x1c] sm:$0xf]
    %v1873 = vld [vmem:[%s7 + $0x20] sm:$0xf]
    %v1874 = vld [vmem:[%s7 + $0x24] sm:$0xf]
    %v1875 = vld [vmem:[%s7 + $0x28] sm:$0xf]
    %v1876 = vld [vmem:[%s7 + $0x2c] sm:$0xf]
    %v1877 = vld [vmem:[%s7 + $0x30] sm:$0xf]
    %v1878 = vld [vmem:[%s7 + $0x34] sm:$0xf]
    %v1879 = vld [vmem:[%s7 + $0x38] sm:$0xf]
    %v1880 = vld [vmem:[%s7 + $0x3c] sm:$0xf]
    %v1881 = vld [vmem:[%s7 + $0x40] sm:$0xf]
    %v1882 = vld [vmem:[%s7 + $0x44] sm:$0xf]
    %v1883 = vld [vmem:[%s7 + $0x48] sm:$0xf]
    %v1884 = vld [vmem:[%s7 + $0x4c] sm:$0xf]
    %v1885 = vld [vmem:[%s7 + $0x50] sm:$0xf]
    %v1886 = vld [vmem:[%s7 + $0x54] sm:$0xf]
    %v1887 = vld [vmem:[%s7 + $0x58] sm:$0xf]
    %v1888 = vld [vmem:[%s7 + $0x5c] sm:$0xf]
    %v1889 = vld [vmem:[%s7 + $0x60] sm:$0xf]
    %v1890 = vld [vmem:[%s7 + $0x64] sm:$0xf]
    %v1891 = vld [vmem:[%s7 + $0x68] sm:$0xf]
    %v1892 = vld [vmem:[%s7 + $0x6c] sm:$0xf]
    %v1893 = vld [vmem:[%s7 + $0x70] sm:$0xf]
    %v1894 = vld [vmem:[%s7 + $0x74] sm:$0xf]
    %v1895 = vld [vmem:[%s7 + $0x78] sm:$0xf]
    %v1896 = vld [vmem:[%s7 + $0x7c] sm:$0xf]
    %v1897 = vld [vmem:[%s8] sm:$0x1]
    %v1899 = vlaneseq
    %v1900 = vshrl.u32 %v1899, 7
    %v1901 = vsub.s32 0, %v1900
    %v1902 = vrot.slane %v1897, %v1901
    %v1936 = vunpack.c.l.b16 %v1865
    %v1937 = vunpack.c.l.b16 %v1866
    %v1938 = vunpack.c.l.b16 %v1867
    %v1939 = vunpack.c.l.b16 %v1868
    %v1940 = vunpack.c.l.b16 %v1869
    %v1941 = vunpack.c.l.b16 %v1870
    %v1942 = vunpack.c.l.b16 %v1871
    %v1943 = vunpack.c.l.b16 %v1872
    %v1944 = vunpack.c.l.b16 %v1873
    %v1945 = vunpack.c.l.b16 %v1874
    %v1946 = vunpack.c.l.b16 %v1875
    %v1947 = vunpack.c.l.b16 %v1876
    %v1948 = vunpack.c.l.b16 %v1877
    %v1949 = vunpack.c.l.b16 %v1878
    %v1950 = vunpack.c.l.b16 %v1879
    %v1951 = vunpack.c.l.b16 %v1880
    %v1952 = vunpack.c.l.b16 %v1881
    %v1953 = vunpack.c.l.b16 %v1882
    %v1954 = vunpack.c.l.b16 %v1883
    %v1955 = vunpack.c.l.b16 %v1884
    %v1956 = vunpack.c.l.b16 %v1885
    %v1957 = vunpack.c.l.b16 %v1886
    %v1958 = vunpack.c.l.b16 %v1887
    %v1959 = vunpack.c.l.b16 %v1888
    %v1960 = vunpack.c.l.b16 %v1889
    %v1961 = vunpack.c.l.b16 %v1890
    %v1962 = vunpack.c.l.b16 %v1891
    %v1963 = vunpack.c.l.b16 %v1892
    %v1964 = vunpack.c.l.b16 %v1893
    %v1965 = vunpack.c.l.b16 %v1894
    %v1966 = vunpack.c.l.b16 %v1895
    %v1967 = vunpack.c.l.b16 %v1896
    %v1968 = vpack.c.b16 %v1937, %v1936
    %v1969 = vpack.c.b16 %v1939, %v1938
    %v1970 = vpack.c.b16 %v1941, %v1940
    %v1971 = vpack.c.b16 %v1943, %v1942
    %v1972 = vpack.c.b16 %v1945, %v1944
    %v1973 = vpack.c.b16 %v1947, %v1946
    %v1974 = vpack.c.b16 %v1949, %v1948
    %v1975 = vpack.c.b16 %v1951, %v1950
    %v1976 = vpack.c.b16 %v1953, %v1952
    %v1977 = vpack.c.b16 %v1955, %v1954
    %v1978 = vpack.c.b16 %v1957, %v1956
    %v1979 = vpack.c.b16 %v1959, %v1958
    %v1980 = vpack.c.b16 %v1961, %v1960
    %v1981 = vpack.c.b16 %v1963, %v1962
    %v1982 = vpack.c.b16 %v1965, %v1964
    %v1983 = vpack.c.b16 %v1967, %v1966
    %2000 = vmatprep.subr.bf16.mxu0 0
    %2001 = vmatpush1.bf16.msra.mxu0 %v1968
    %2002 = vmatprep.subr.bf16.mxu0 0
    %2003 = vmatpush1.bf16.msra.mxu0 %v1969
    %2004 = vmatprep.subr.bf16.mxu0 0
    %2005 = vmatpush1.bf16.msra.mxu0 %v1970
    %2006 = vmatprep.subr.bf16.mxu0 0
    %2007 = vmatpush1.bf16.msra.mxu0 %v1971
    %2008 = vmatprep.subr.bf16.mxu0 0
    %2009 = vmatpush1.bf16.msra.mxu0 %v1972
    %2010 = vmatprep.subr.bf16.mxu0 0
    %2011 = vmatpush1.bf16.msra.mxu0 %v1973
    %2012 = vmatprep.subr.bf16.mxu0 0
    %2013 = vmatpush1.bf16.msra.mxu0 %v1974
    %2014 = vmatprep.subr.bf16.mxu0 0
    %2015 = vmatpush1.bf16.msra.mxu0 %v1975
    %2016 = vmatprep.subr.bf16.mxu0 0
    %2017 = vmatpush1.bf16.msra.mxu0 %v1976
    %2018 = vmatprep.subr.bf16.mxu0 0
    %2019 = vmatpush1.bf16.msra.mxu0 %v1977
    %2020 = vmatprep.subr.bf16.mxu0 0
    %2021 = vmatpush1.bf16.msra.mxu0 %v1978
    %2022 = vmatprep.subr.bf16.mxu0 0
    %2023 = vmatpush1.bf16.msra.mxu0 %v1979
    %2024 = vmatprep.subr.bf16.mxu0 0
    %2025 = vmatpush1.bf16.msra.mxu0 %v1980
    %2026 = vmatprep.subr.bf16.mxu0 0
    %2027 = vmatpush1.bf16.msra.mxu0 %v1981
    %2028 = vmatprep.subr.bf16.mxu0 0
    %2029 = vmatpush1.bf16.msra.mxu0 %v1982
    %2030 = vmatprep.subr.bf16.mxu0 0
    %2031 = vmatpush1.bf16.msra.mxu0 %v1983
    %2032 = vmatprep.mubr.bf16.mxu0 %v1864
    %2033 = vmatmul.mubr.bf16.gmra.mrb[0].mxu0 %v1863
    %v2034 = vpop.f32.mrb[0].mxu0
    %v2035 = vadd.f32 %v1902, %v2034
    %v2036 = vpop.f32.mrb[0].mxu0
    %v2037 = vpop.f32.mrb[0].mxu0
    %v2038 = vpop.f32.mrb[0].mxu0
    %2039 = vdwg.mxu0
    %2040 = vst [vmem:[#allocation5] sm:$0x3] %v2035
    // Predicated region
    $region42: #{directnet_forward.1} parent=1 // pred_check
      _
    $region43: #{directnet_forward.1} parent=1 // pred_check_branch
      %2042 = sbr.rel (0) target = $region45
    $region44: #{directnet_forward.1} parent=1 // pred_region
      %s2044 = ssub.s32 32, 32
      %2045 = vsyncadd [#allocation4], %s2044
      %s2047 = sshll.u32 [#allocation5], 4
      %s2048 = int_to_ptr.vmem [resolvable:$true] %s2047
      %2050 = dma.vmem_to_hbm [thread:$0]  %s2048, 32, %s9, [#allocation4]
    $region45: #{directnet_forward.1} parent=1 // pred_fallthru
      _
    // Predicated region
    $region46: #{directnet_forward.1} parent=1 // pred_check
      _
    $region47: #{directnet_forward.1} parent=1 // pred_check_branch
      %2052 = sbr.rel (0) target = $region49
    $region48: #{directnet_forward.1} parent=1 // pred_region
      %2053 = dma.done [#allocation4], 32
    $region49: #{directnet_forward.1} parent=1 // pred_fallthru
      _
    %2054 = vsyncpa [#allocation3], 1
    %2055 = vsyncpa [#allocation4], 1

</llo_original>
